<compile_context>
chip_gen: v5e
topology: v5e:2x2
jax: 0.10.0
libtpu: 0.0.40
codegen_flags: <defaults>
</compile_context>

<pallas_src>
import math
import jax
import jax.numpy as jnp
from jax.experimental import pallas as pl
from jax.experimental.pallas import tpu as pltpu


# ---------------------------------------------------------------------------
# Kernel: fused MLP forward (both ZeroOutput towers already folded into the
# weights at prep time) + lane-packed scalar readout.
# ---------------------------------------------------------------------------
def make_zero_output_kernel(b_const, num_hidden, pack_rows):
    def act(z):
        if b_const == 0.0:
            return jnp.maximum(z, 0.0)                 # plain ReLU: 1 VALU op
        if 0.0 < b_const < 1.0:
            return jnp.maximum(z, b_const * z)         # leaky/ABReLU: mul + max
        return jnp.where(z > 0.0, z, b_const * z)      # general slope

    def kernel(*refs):
        x_ref = refs[0]
        w_refs = refs[1:1 + num_hidden]
        wro_ref = refs[1 + num_hidden]
        o_ref = refs[2 + num_hidden]

        h = x_ref[...]
        for w_ref in w_refs:
            h = act(jnp.dot(h, w_ref[...], preferred_element_type=jnp.float32))

        # Folded readout: subtraction of the init tower and `scaling` are baked into
        # wro (concat-K with +/-scaling columns). Only column 0 carries the result.
        p = jnp.dot(h, wro_ref[...], preferred_element_type=jnp.float32)   # (bm, 128)

        # Lane-pack: column 0 of every 128-row chunk -> one lane-dense 128-wide row.
        rows = []
        for r in range(pack_rows):                      # static, small (<= 8)
            blk = p[r * 128:(r + 1) * 128, :]           # (128, 128)
            rows.append(blk.T[0:1, :])                  # XLU transpose; row 0 == col 0
        o_ref[...] = jnp.concatenate(rows, axis=0)      # (pack_rows, 128), unmasked vst

    return kernel


# ---------------------------------------------------------------------------
# Wrapper
# ---------------------------------------------------------------------------
def zero_output_forward(x, fused_params, *, outp_dim=1, b_const=0.0, block_batch=1024):
    """x: (batch, inp_dim) f32.  fused_params: output of prepare_zero_output_params.
    Returns (batch, outp_dim) with outp_dim == 1 (scalar readout)."""
    ws, wro = fused_params
    batch, inp_dim = x.shape
    assert outp_dim == 1, "lane-packed output path assumes a scalar readout"
    assert batch % 128 == 0 and inp_dim % 128 == 0

    bm = min(block_batch, batch)
    assert batch % bm == 0, "batch must be divisible by the batch tile"
    if bm < batch:
        # Packed output block is (bm//128, 128); keep its sublane dim a multiple of 8.
        assert bm % 1024 == 0, "use bm == batch or a multiple of 1024 when tiling"
    pack_rows = bm // 128

    kernel = make_zero_output_kernel(b_const, len(ws), pack_rows)

    def weight_spec(w):
        # Full-array block; constant index_map -> weight stays VMEM-resident across steps.
        return pl.BlockSpec(w.shape, lambda i: (0, 0))

    in_specs = [pl.BlockSpec((bm, inp_dim), lambda i: (i, 0))]
    in_specs += [weight_spec(w) for w in ws] + [weight_spec(wro)]
    out_specs = pl.BlockSpec((pack_rows, 128), lambda i: (i, 0))

    packed = pl.pallas_call(
        kernel,
        out_shape=jax.ShapeDtypeStruct((batch // 128, 128), jnp.float32),
        grid=(batch // bm,),
        in_specs=in_specs,
        out_specs=out_specs,
        compiler_params=pltpu.CompilerParams(
            dimension_semantics=("parallel",)),
    )(x, *ws, wro)

    # packed[i, j] == out[i*128 + j]; row-major reshape restores batch order.
    return packed.reshape(batch, 1)


# ---------------------------------------------------------------------------
# One-time parameter prep (load time, never in the per-call hot path)
# ---------------------------------------------------------------------------
def pad_readout(wro, out_pad=128):
    """Zero-pad the readout's output columns to a lane-dense width."""
    d_in, outp = wro.shape
    assert outp <= out_pad
    return jnp.pad(wro, ((0, 0), (0, out_pad - outp)))


def prepare_zero_output_params(module_params, init_params=None, *, scaling=1.0,
                               subtract=True, out_pad=128):
    """Fold both ZeroOutput towers, the subtraction and `scaling` into one MLP's weights.

    subtract=True:
        layer 0:    concat([W0, V0], axis=1)                         (in, 2h)
        layer i>=1: block_diag(W_i, V_i)                             (2h, 2h)
        readout:    concat([scaling*Wro_pad, -scaling*Vro_pad], 0)   (2h, 128)
    so the kernel's single readout matmul directly yields scaling*(module(x)-init(x)).
    (A torch (out,in) Linear weight would be transposed once here at load time.)
    """
    ws, wro = module_params
    if not subtract:
        return [w for w in ws], scaling * pad_readout(wro, out_pad)

    assert init_params is not None
    vs, vro = init_params
    assert len(vs) == len(ws)
    if len(ws) == 0:  # pure linear readout: subtraction folds fully into one matrix
        return [], scaling * (pad_readout(wro, out_pad) - pad_readout(vro, out_pad))

    fused = [jnp.concatenate([ws[0], vs[0]], axis=1)]
    for w, v in zip(ws[1:], vs[1:]):
        top = jnp.concatenate([w, jnp.zeros((w.shape[0], v.shape[1]), w.dtype)], axis=1)
        bot = jnp.concatenate([jnp.zeros((v.shape[0], w.shape[1]), v.dtype), v], axis=1)
        fused.append(jnp.concatenate([top, bot], axis=0))
    wro_c = jnp.concatenate([scaling * pad_readout(wro, out_pad),
                             -scaling * pad_readout(vro, out_pad)], axis=0)
    return fused, wro_c


def init_mlp_params(key, inp_dim, hdims, outp_dim, b_const=0.0, scaling_init=1.0):
    """Random bias-free MLP weights, already in (in, out) kernel layout."""
    ws = []
    d_in = inp_dim
    for d_out in hdims:
        key, sub = jax.random.split(key)
        std = scaling_init * math.sqrt(2.0 / ((b_const - 1.0) ** 2 * d_in))
        ws.append(std * jax.random.normal(sub, (d_in, d_out), jnp.float32))
        d_in = d_out
    key, sub = jax.random.split(key)
    std = scaling_init * math.sqrt(2.0 / ((b_const - 1.0) ** 2 * d_in))
    wro = std * jax.random.normal(sub, (d_in, outp_dim), jnp.float32)
    return ws, wro


# ---------------------------------------------------------------------------
# Pure-JAX reference (ZeroOutput semantics, un-fused)
# ---------------------------------------------------------------------------
def zero_output_reference(x, module_params, init_params, scaling, b_const, subtract=True):
    def act(z):
        return jnp.maximum(z, 0.0) if b_const == 0.0 else jnp.where(z > 0.0, z, b_const * z)

    def mlp(params):
        ws, wro = params
        h = x
        for w in ws:
            h = act(h @ w)
        return h @ wro

    if subtract:
        return scaling * (mlp(module_params) - mlp(init_params))
    return scaling * mlp(module_params)


# ---------------------------------------------------------------------------
# Demo / correctness check
# ---------------------------------------------------------------------------
if __name__ == "__main__":
    key = jax.random.PRNGKey(0)

    batch, inp_dim = 256, 128
    hdims = [128, 128]
    outp_dim = 1
    scaling = 0.5
    b_const = 0.0            # ABReLU with b=0 -> plain ReLU inside the wrapped module

    key, kx = jax.random.split(key)
    x = jax.random.normal(kx, (batch, inp_dim), jnp.float32)

    # Frozen init copy (deepcopy-at-construction semantics of ZeroOutput).
    key, kp = jax.random.split(key)
    init_ws, init_wro = init_mlp_params(kp, inp_dim, hdims, outp_dim, b_const)

    # "Trained" live module = init weights + small perturbation (else output is ~0).
    mod_ws = []
    for w in init_ws:
        key, kd = jax.random.split(key)
        mod_ws.append(w + 0.05 * jax.random.normal(kd, w.shape, jnp.float32))
    key, kd = jax.random.split(key)
    mod_wro = init_wro + 0.05 * jax.random.normal(kd, init_wro.shape, jnp.float32)

    # ---- subtract=True (ZeroOutput default): both towers fused at prep time ----
    fused = prepare_zero_output_params((mod_ws, mod_wro), (init_ws, init_wro),
                                       scaling=scaling, subtract=True)
    out = zero_output_forward(x, fused, outp_dim=outp_dim, b_const=b_const)
    out = jax.block_until_ready(out)

    ref = zero_output_reference(x, (mod_ws, mod_wro), (init_ws, init_wro),
                                scaling, b_const, subtract=True)
    assert out.shape == (batch, outp_dim)
    # f32 MXU accumulation / fused-K ordering differs from XLA's; allow small slack.
    assert jnp.allclose(out, ref, atol=2e-3, rtol=2e-3), "mismatch vs reference (subtract=True)"

    # ---- subtract=False branch (scaling * module(x)) shares the same kernel ----
    fused_ns = prepare_zero_output_params((mod_ws, mod_wro), None,
                                          scaling=scaling, subtract=False)
    out_ns = zero_output_forward(x, fused_ns, outp_dim=outp_dim, b_const=b_const)
    out_ns = jax.block_until_ready(out_ns)
    ref_ns = zero_output_reference(x, (mod_ws, mod_wro), None,
                                   scaling, b_const, subtract=False)
    assert jnp.allclose(out_ns, ref_ns, atol=2e-3, rtol=2e-3), "mismatch vs reference (subtract=False)"

    print("KERNEL_OK")
</pallas_src>

<mosaic_0001>
module attributes {stable_mosaic.version = 11 : i64} {
  func.func @kernel(%arg0: i32, %arg1: memref<256x128xf32, #tpu.memory_space<vmem>>, %arg2: memref<128x256xf32, #tpu.memory_space<vmem>>, %arg3: memref<256x256xf32, #tpu.memory_space<vmem>>, %arg4: memref<256x128xf32, #tpu.memory_space<vmem>>, %arg5: memref<2x128xf32, #tpu.memory_space<vmem>>) attributes {dimension_semantics = [#tpu.dimension_semantics<parallel>], iteration_bounds = array<i64: 1>, scalar_prefetch = 0 : i64, scratch_operands = 0 : i64, tpu.core_type = #tpu.core_type<tc>, window_params = [{transform_indices = @transform_0, window_bounds = array<i64: 256, 128>}, {pipeline_mode = #tpu.pipeline_mode<synchronous>, transform_indices = @transform_1, window_bounds = array<i64: 128, 256>}, {pipeline_mode = #tpu.pipeline_mode<synchronous>, transform_indices = @transform_2, window_bounds = array<i64: 256, 256>}, {pipeline_mode = #tpu.pipeline_mode<synchronous>, transform_indices = @transform_3, window_bounds = array<i64: 256, 128>}, {transform_indices = @transform_4, window_bounds = array<i64: 2, 128>}]} {
    %c0 = arith.constant 0 : index
    %c0_0 = arith.constant 0 : index
    %0 = vector.load %arg1[%c0, %c0_0] : memref<256x128xf32, #tpu.memory_space<vmem>>, vector<256x128xf32>
    %c0_1 = arith.constant 0 : index
    %c0_2 = arith.constant 0 : index
    %1 = vector.load %arg2[%c0_1, %c0_2] : memref<128x256xf32, #tpu.memory_space<vmem>>, vector<128x256xf32>
    %cst = arith.constant dense<0.000000e+00> : vector<256x256xf32>
    %2 = tpu.matmul %0, %1, %cst {dimension_numbers = #tpu.dot_dimension_numbers<[1], [0], [0], [1], [0, 0, 1, 1], [], []>} : vector<256x128xf32>, vector<128x256xf32>, vector<256x256xf32> -> vector<256x256xf32>
    %cst_3 = arith.constant 0.000000e+00 : f32
    %3 = vector.broadcast %cst_3 : f32 to vector<256x256xf32>
    %4 = arith.maximumf %2, %3 : vector<256x256xf32>
    %c0_4 = arith.constant 0 : index
    %c0_5 = arith.constant 0 : index
    %5 = vector.load %arg3[%c0_4, %c0_5] : memref<256x256xf32, #tpu.memory_space<vmem>>, vector<256x256xf32>
    %cst_6 = arith.constant dense<0.000000e+00> : vector<256x256xf32>
    %6 = tpu.matmul %4, %5, %cst_6 {dimension_numbers = #tpu.dot_dimension_numbers<[1], [0], [0], [1], [0, 0, 1, 1], [], []>} : vector<256x256xf32>, vector<256x256xf32>, vector<256x256xf32> -> vector<256x256xf32>
    %cst_7 = arith.constant 0.000000e+00 : f32
    %7 = vector.broadcast %cst_7 : f32 to vector<256x256xf32>
    %8 = arith.maximumf %6, %7 : vector<256x256xf32>
    %c0_8 = arith.constant 0 : index
    %c0_9 = arith.constant 0 : index
    %9 = vector.load %arg4[%c0_8, %c0_9] : memref<256x128xf32, #tpu.memory_space<vmem>>, vector<256x128xf32>
    %cst_10 = arith.constant dense<0.000000e+00> : vector<256x128xf32>
    %10 = tpu.matmul %8, %9, %cst_10 {dimension_numbers = #tpu.dot_dimension_numbers<[1], [0], [0], [1], [0, 0, 1, 1], [], []>} : vector<256x256xf32>, vector<256x128xf32>, vector<256x128xf32> -> vector<256x128xf32>
    %11 = vector.extract_strided_slice %10 {offsets = [0, 0], sizes = [128, 128], strides = [1, 1]} : vector<256x128xf32> to vector<128x128xf32>
    %12 = tpu.transpose %11, [1, 0] : vector<128x128xf32> -> vector<128x128xf32>
    %13 = vector.extract_strided_slice %12 {offsets = [0, 0], sizes = [1, 128], strides = [1, 1]} : vector<128x128xf32> to vector<1x128xf32>
    %14 = vector.extract_strided_slice %10 {offsets = [128, 0], sizes = [128, 128], strides = [1, 1]} : vector<256x128xf32> to vector<128x128xf32>
    %15 = tpu.transpose %14, [1, 0] : vector<128x128xf32> -> vector<128x128xf32>
    %16 = vector.extract_strided_slice %15 {offsets = [0, 0], sizes = [1, 128], strides = [1, 1]} : vector<128x128xf32> to vector<1x128xf32>
    %17 = tpu.concatenate %13, %16 in 0 : vector<1x128xf32>, vector<1x128xf32> -> vector<2x128xf32>
    %c0_11 = arith.constant 0 : index
    %c0_12 = arith.constant 0 : index
    %18 = vector.load %arg5[%c0_11, %c0_12] : memref<2x128xf32, #tpu.memory_space<vmem>>, vector<2x128xf32>
    tpu.vector_store %arg5[%c0_11, %c0_12], %17 {strides = array<i32>} : memref<2x128xf32, #tpu.memory_space<vmem>>, vector<2x128xf32>,
    return
  }
  func.func @transform_0(%arg0: i32) -> (i32, i32) {
    %c0_i32 = arith.constant 0 : i32
    %c0_i32_0 = arith.constant 0 : i32
    return %arg0, %c0_i32 : i32, i32
  }
  func.func @transform_1(%arg0: i32) -> (i32, i32) {
    %c0_i32 = arith.constant 0 : i32
    %c0_i32_0 = arith.constant 0 : i32
    %c0_i32_1 = arith.constant 0 : i32
    return %c0_i32, %c0_i32_0 : i32, i32
  }
  func.func @transform_2(%arg0: i32) -> (i32, i32) {
    %c0_i32 = arith.constant 0 : i32
    %c0_i32_0 = arith.constant 0 : i32
    %c0_i32_1 = arith.constant 0 : i32
    return %c0_i32, %c0_i32_0 : i32, i32
  }
  func.func @transform_3(%arg0: i32) -> (i32, i32) {
    %c0_i32 = arith.constant 0 : i32
    %c0_i32_0 = arith.constant 0 : i32
    %c0_i32_1 = arith.constant 0 : i32
    return %c0_i32, %c0_i32_0 : i32, i32
  }
  func.func @transform_4(%arg0: i32) -> (i32, i32) {
    %c0_i32 = arith.constant 0 : i32
    %c0_i32_0 = arith.constant 0 : i32
    return %arg0, %c0_i32 : i32, i32
  }
}

</mosaic_0001>

<llo_original>
// kernel: tpu_custom_call.1
$region0: #{tpu_custom_call.1}
  #allocation0 [shape = 'u32[]', space=smem, size = 0x4, offset = 0x4, fixed_abs, tag = 'smem constant byte address 0x4 - core index']
  #allocation1 [shape = 'u32[72,128]{1,0:T(1,128)}', space=vmem, size = 0x9000, scoped, tag = 'internal scratch']
  %s0 = inlined_call_operand.hbm [shape: f32[256,128], index: 0, kind: input, shape index: {}]
  %s1 = inlined_call_operand.hbm [shape: f32[128,256], index: 1, kind: input, shape index: {}]
  %s2 = inlined_call_operand.hbm [shape: f32[256,256], index: 2, kind: input, shape index: {}]
  %s3 = inlined_call_operand.hbm [shape: f32[256,128], index: 3, kind: input, shape index: {}]
  %s4 = inlined_call_operand.hbm [shape: f32[2,128], index: 4, kind: output, shape index: {}]
  %s5 = sld [smem:[#allocation0]]
  $region42: #{tpu_custom_call.1} parent=0
    _
  %s7 = ssub.s32 1, %s5
  %s8 = scalar_select 0, %s7, %s5
  $region1: #{tpu_custom_call.1} parent=0
    #allocation2 [shape = 'u8[131072]{0}', space=vmem, size = 0x20000, scoped, tag = 'input window, operand 0, single buffered']
    #allocation3 [shape = 's32[1]{0}', space=sflag, size = 0x4, scoped, tag = 'scoped memory for tpu_custom_call.1']
    #allocation4 [shape = 's32[1]{0}', space=sflag, size = 0x4, scoped, tag = 'scoped memory for tpu_custom_call.1']
    #allocation5 [shape = 'u8[131072]{0}', space=vmem, size = 0x20000, scoped, tag = 'input window, operand 1, single buffered']
    #allocation6 [shape = 's32[1]{0}', space=sflag, size = 0x4, scoped, tag = 'scoped memory for tpu_custom_call.1']
    #allocation7 [shape = 'u8[262144]{0}', space=vmem, size = 0x40000, scoped, tag = 'input window, operand 2, single buffered']
    #allocation8 [shape = 'u8[131072]{0}', space=vmem, size = 0x20000, scoped, tag = 'input window, operand 3, single buffered']
    #allocation9 [shape = 's32[1]{0}', space=sflag, size = 0x4, scoped, tag = 'scoped memory for tpu_custom_call.1']
    #allocation10 [shape = 'u8[1024]{0}', space=vmem, size = 0x400, scoped, tag = 'output window, operand 0, single buffered']
    %9 = vsyncpa [#allocation3], 0
    %10 = vsyncpa [#allocation6], 0
    %11 = vsyncpa [#allocation9], 0
    %12 = vsyncpa [#allocation4], 0
    // Predicated region
    $region2: #{tpu_custom_call.1} parent=1 // pred_check
      _
    $region3: #{tpu_custom_call.1} parent=1 // pred_check_branch
      %14 = sbr.rel (0) target = $region5
    $region4: #{tpu_custom_call.1} parent=1 // pred_region
      %16 = vsyncadd [#allocation3], 0
      %s17 = sshll.u32 %s0, 4
      %s18 = int_to_ptr.hbm [resolvable:$true] %s17
      %s19 = sshll.u32 [#allocation2], 4
      %s20 = int_to_ptr.vmem [resolvable:$true] %s19
      %25 = dma.hbm_to_vmem [thread:$0]  %s18, 4096, %s20, [#allocation3], 128, 128, 8
    $region5: #{tpu_custom_call.1} parent=1 // pred_fallthru
      _
    // Predicated region
    $region6: #{tpu_custom_call.1} parent=1 // pred_check
      _
    $region7: #{tpu_custom_call.1} parent=1 // pred_check_branch
      %27 = sbr.rel (0) target = $region9
    $region8: #{tpu_custom_call.1} parent=1 // pred_region
      %29 = vsyncadd [#allocation6], 0
      %s30 = sshll.u32 %s1, 4
      %s31 = int_to_ptr.hbm [resolvable:$true] %s30
      %s32 = sshll.u32 [#allocation5], 4
      %s33 = int_to_ptr.vmem [resolvable:$true] %s32
      %38 = dma.hbm_to_vmem [thread:$0]  %s31, 4096, %s33, [#allocation6], 256, 256, 16
    $region9: #{tpu_custom_call.1} parent=1 // pred_fallthru
      _
    // Predicated region
    $region10: #{tpu_custom_call.1} parent=1 // pred_check
      _
    $region11: #{tpu_custom_call.1} parent=1 // pred_check_branch
      %40 = sbr.rel (0) target = $region13
    $region12: #{tpu_custom_call.1} parent=1 // pred_region
      %42 = vsyncadd [#allocation6], 0
      %s43 = sshll.u32 %s2, 4
      %s44 = int_to_ptr.hbm [resolvable:$true] %s43
      %s45 = sshll.u32 [#allocation7], 4
      %s46 = int_to_ptr.vmem [resolvable:$true] %s45
      %51 = dma.hbm_to_vmem [thread:$0]  %s44, 8192, %s46, [#allocation6], 256, 256, 16
    $region13: #{tpu_custom_call.1} parent=1 // pred_fallthru
      _
    // Predicated region
    $region14: #{tpu_custom_call.1} parent=1 // pred_check
      _
    $region15: #{tpu_custom_call.1} parent=1 // pred_check_branch
      %53 = sbr.rel (0) target = $region17
    $region16: #{tpu_custom_call.1} parent=1 // pred_region
      %55 = vsyncadd [#allocation9], 0
      %s56 = sshll.u32 %s3, 4
      %s57 = int_to_ptr.hbm [resolvable:$true] %s56
      %s58 = sshll.u32 [#allocation8], 4
      %s59 = int_to_ptr.vmem [resolvable:$true] %s58
      %64 = dma.hbm_to_vmem [thread:$0]  %s57, 4096, %s59, [#allocation9], 128, 128, 8
    $region17: #{tpu_custom_call.1} parent=1 // pred_fallthru
      _
    // Predicated region
    $region18: #{tpu_custom_call.1} parent=1 // pred_check
      _
    $region19: #{tpu_custom_call.1} parent=1 // pred_check_branch
      %66 = sbr.rel (0) target = $region21
    $region20: #{tpu_custom_call.1} parent=1 // pred_region
      %68 = dma.done [#allocation3], 4096
    $region21: #{tpu_custom_call.1} parent=1 // pred_fallthru
      _
    // Predicated region
    $region22: #{tpu_custom_call.1} parent=1 // pred_check
      _
    $region23: #{tpu_custom_call.1} parent=1 // pred_check_branch
      %70 = sbr.rel (0) target = $region25
    $region24: #{tpu_custom_call.1} parent=1 // pred_region
      %72 = dma.done [#allocation6], 4096
    $region25: #{tpu_custom_call.1} parent=1 // pred_fallthru
      _
    // Predicated region
    $region26: #{tpu_custom_call.1} parent=1 // pred_check
      _
    $region27: #{tpu_custom_call.1} parent=1 // pred_check_branch
      %74 = sbr.rel (0) target = $region29
    $region28: #{tpu_custom_call.1} parent=1 // pred_region
      %76 = dma.done [#allocation6], 8192
    $region29: #{tpu_custom_call.1} parent=1 // pred_fallthru
      _
    // Predicated region
    $region30: #{tpu_custom_call.1} parent=1 // pred_check
      _
    $region31: #{tpu_custom_call.1} parent=1 // pred_check_branch
      %78 = sbr.rel (0) target = $region33
    $region32: #{tpu_custom_call.1} parent=1 // pred_region
      %80 = dma.done [#allocation9], 4096
    $region33: #{tpu_custom_call.1} parent=1 // pred_fallthru
      _
    %v81 = vld [vmem:[#allocation2] sm:$0xff]
    %v82 = vld [vmem:[#allocation2 + $0x8] sm:$0xff]
    %v83 = vld [vmem:[#allocation2 + $0x10] sm:$0xff]
    %v84 = vld [vmem:[#allocation2 + $0x18] sm:$0xff]
    %v85 = vld [vmem:[#allocation2 + $0x20] sm:$0xff]
    %v86 = vld [vmem:[#allocation2 + $0x28] sm:$0xff]
    %v87 = vld [vmem:[#allocation2 + $0x30] sm:$0xff]
    %v88 = vld [vmem:[#allocation2 + $0x38] sm:$0xff]
    %v89 = vld [vmem:[#allocation2 + $0x40] sm:$0xff]
    %v90 = vld [vmem:[#allocation2 + $0x48] sm:$0xff]
    %v91 = vld [vmem:[#allocation2 + $0x50] sm:$0xff]
    %v92 = vld [vmem:[#allocation2 + $0x58] sm:$0xff]
    %v93 = vld [vmem:[#allocation2 + $0x60] sm:$0xff]
    %v94 = vld [vmem:[#allocation2 + $0x68] sm:$0xff]
    %v95 = vld [vmem:[#allocation2 + $0x70] sm:$0xff]
    %v96 = vld [vmem:[#allocation2 + $0x78] sm:$0xff]
    %v97 = vld [vmem:[#allocation2 + $0x80] sm:$0xff]
    %v98 = vld [vmem:[#allocation2 + $0x88] sm:$0xff]
    %v99 = vld [vmem:[#allocation2 + $0x90] sm:$0xff]
    %v100 = vld [vmem:[#allocation2 + $0x98] sm:$0xff]
    %v101 = vld [vmem:[#allocation2 + $0xa0] sm:$0xff]
    %v102 = vld [vmem:[#allocation2 + $0xa8] sm:$0xff]
    %v103 = vld [vmem:[#allocation2 + $0xb0] sm:$0xff]
    %v104 = vld [vmem:[#allocation2 + $0xb8] sm:$0xff]
    %v105 = vld [vmem:[#allocation2 + $0xc0] sm:$0xff]
    %v106 = vld [vmem:[#allocation2 + $0xc8] sm:$0xff]
    %v107 = vld [vmem:[#allocation2 + $0xd0] sm:$0xff]
    %v108 = vld [vmem:[#allocation2 + $0xd8] sm:$0xff]
    %v109 = vld [vmem:[#allocation2 + $0xe0] sm:$0xff]
    %v110 = vld [vmem:[#allocation2 + $0xe8] sm:$0xff]
    %v111 = vld [vmem:[#allocation2 + $0xf0] sm:$0xff]
    %v112 = vld [vmem:[#allocation2 + $0xf8] sm:$0xff]
    %v113 = vld [vmem:[#allocation5] sm:$0xff]
    %v114 = vld [vmem:[#allocation5 + $0x8] sm:$0xff]
    %v115 = vld [vmem:[#allocation5 + $0x10] sm:$0xff]
    %v116 = vld [vmem:[#allocation5 + $0x18] sm:$0xff]
    %v117 = vld [vmem:[#allocation5 + $0x20] sm:$0xff]
    %v118 = vld [vmem:[#allocation5 + $0x28] sm:$0xff]
    %v119 = vld [vmem:[#allocation5 + $0x30] sm:$0xff]
    %v120 = vld [vmem:[#allocation5 + $0x38] sm:$0xff]
    %v121 = vld [vmem:[#allocation5 + $0x40] sm:$0xff]
    %v122 = vld [vmem:[#allocation5 + $0x48] sm:$0xff]
    %v123 = vld [vmem:[#allocation5 + $0x50] sm:$0xff]
    %v124 = vld [vmem:[#allocation5 + $0x58] sm:$0xff]
    %v125 = vld [vmem:[#allocation5 + $0x60] sm:$0xff]
    %v126 = vld [vmem:[#allocation5 + $0x68] sm:$0xff]
    %v127 = vld [vmem:[#allocation5 + $0x70] sm:$0xff]
    %v128 = vld [vmem:[#allocation5 + $0x78] sm:$0xff]
    %v129 = vld [vmem:[#allocation5 + $0x80] sm:$0xff]
    %v130 = vld [vmem:[#allocation5 + $0x88] sm:$0xff]
    %v131 = vld [vmem:[#allocation5 + $0x90] sm:$0xff]
    %v132 = vld [vmem:[#allocation5 + $0x98] sm:$0xff]
    %v133 = vld [vmem:[#allocation5 + $0xa0] sm:$0xff]
    %v134 = vld [vmem:[#allocation5 + $0xa8] sm:$0xff]
    %v135 = vld [vmem:[#allocation5 + $0xb0] sm:$0xff]
    %v136 = vld [vmem:[#allocation5 + $0xb8] sm:$0xff]
    %v137 = vld [vmem:[#allocation5 + $0xc0] sm:$0xff]
    %v138 = vld [vmem:[#allocation5 + $0xc8] sm:$0xff]
    %v139 = vld [vmem:[#allocation5 + $0xd0] sm:$0xff]
    %v140 = vld [vmem:[#allocation5 + $0xd8] sm:$0xff]
    %v141 = vld [vmem:[#allocation5 + $0xe0] sm:$0xff]
    %v142 = vld [vmem:[#allocation5 + $0xe8] sm:$0xff]
    %v143 = vld [vmem:[#allocation5 + $0xf0] sm:$0xff]
    %v144 = vld [vmem:[#allocation5 + $0xf8] sm:$0xff]
    %145 = vmatpush.msra.mxu0 %v143
    %146 = vmatpush.msra.mxu0 %v141
    %147 = vmatpush.msra.mxu0 %v139
    %148 = vmatpush.msra.mxu0 %v137
    %149 = vmatpush.msra.mxu0 %v135
    %150 = vmatpush.msra.mxu0 %v133
    %151 = vmatpush.msra.mxu0 %v131
    %152 = vmatpush.msra.mxu0 %v129
    %153 = vmatpush.msra.mxu0 %v127
    %154 = vmatpush.msra.mxu0 %v125
    %155 = vmatpush.msra.mxu0 %v123
    %156 = vmatpush.msra.mxu0 %v121
    %157 = vmatpush.msra.mxu0 %v119
    %158 = vmatpush.msra.mxu0 %v117
    %159 = vmatpush.msra.mxu0 %v115
    %160 = vmatpush.msra.mxu0 %v113
    %161 = vmatmul.f32.gmra.mxu0 %v81
    %v162 = vpop.f32.mrf.mxu0
    %v163 = vadd.f32 0.0, %v162
    %164 = vmatmul.f32.gmra.mxu0 %v82
    %v165 = vpop.f32.mrf.mxu0
    %v166 = vadd.f32 0.0, %v165
    %167 = vmatmul.f32.gmra.mxu0 %v83
    %v168 = vpop.f32.mrf.mxu0
    %v169 = vadd.f32 0.0, %v168
    %170 = vmatmul.f32.gmra.mxu0 %v84
    %v171 = vpop.f32.mrf.mxu0
    %v172 = vadd.f32 0.0, %v171
    %173 = vmatmul.f32.gmra.mxu0 %v85
    %v174 = vpop.f32.mrf.mxu0
    %v175 = vadd.f32 0.0, %v174
    %176 = vmatmul.f32.gmra.mxu0 %v86
    %v177 = vpop.f32.mrf.mxu0
    %v178 = vadd.f32 0.0, %v177
    %179 = vmatmul.f32.gmra.mxu0 %v87
    %v180 = vpop.f32.mrf.mxu0
    %v181 = vadd.f32 0.0, %v180
    %182 = vmatmul.f32.gmra.mxu0 %v88
    %v183 = vpop.f32.mrf.mxu0
    %v184 = vadd.f32 0.0, %v183
    %185 = vmatmul.f32.gmra.mxu0 %v89
    %v186 = vpop.f32.mrf.mxu0
    %v187 = vadd.f32 0.0, %v186
    %188 = vmatmul.f32.gmra.mxu0 %v90
    %v189 = vpop.f32.mrf.mxu0
    %v190 = vadd.f32 0.0, %v189
    %191 = vmatmul.f32.gmra.mxu0 %v91
    %v192 = vpop.f32.mrf.mxu0
    %v193 = vadd.f32 0.0, %v192
    %194 = vmatmul.f32.gmra.mxu0 %v92
    %v195 = vpop.f32.mrf.mxu0
    %v196 = vadd.f32 0.0, %v195
    %197 = vmatmul.f32.gmra.mxu0 %v93
    %v198 = vpop.f32.mrf.mxu0
    %v199 = vadd.f32 0.0, %v198
    %200 = vmatmul.f32.gmra.mxu0 %v94
    %v201 = vpop.f32.mrf.mxu0
    %v202 = vadd.f32 0.0, %v201
    %203 = vmatmul.f32.gmra.mxu0 %v95
    %v204 = vpop.f32.mrf.mxu0
    %v205 = vadd.f32 0.0, %v204
    %206 = vmatmul.f32.gmra.mxu0 %v96
    %v207 = vpop.f32.mrf.mxu0
    %v208 = vadd.f32 0.0, %v207
    %209 = vmatmul.f32.gmra.mxu0 %v97
    %v210 = vpop.f32.mrf.mxu0
    %v211 = vadd.f32 0.0, %v210
    %212 = vmatmul.f32.gmra.mxu0 %v98
    %v213 = vpop.f32.mrf.mxu0
    %v214 = vadd.f32 0.0, %v213
    %215 = vmatmul.f32.gmra.mxu0 %v99
    %v216 = vpop.f32.mrf.mxu0
    %v217 = vadd.f32 0.0, %v216
    %218 = vmatmul.f32.gmra.mxu0 %v100
    %v219 = vpop.f32.mrf.mxu0
    %v220 = vadd.f32 0.0, %v219
    %221 = vmatmul.f32.gmra.mxu0 %v101
    %v222 = vpop.f32.mrf.mxu0
    %v223 = vadd.f32 0.0, %v222
    %224 = vmatmul.f32.gmra.mxu0 %v102
    %v225 = vpop.f32.mrf.mxu0
    %v226 = vadd.f32 0.0, %v225
    %227 = vmatmul.f32.gmra.mxu0 %v103
    %v228 = vpop.f32.mrf.mxu0
    %v229 = vadd.f32 0.0, %v228
    %230 = vmatmul.f32.gmra.mxu0 %v104
    %v231 = vpop.f32.mrf.mxu0
    %v232 = vadd.f32 0.0, %v231
    %233 = vmatmul.f32.gmra.mxu0 %v105
    %v234 = vpop.f32.mrf.mxu0
    %v235 = vadd.f32 0.0, %v234
    %236 = vmatmul.f32.gmra.mxu0 %v106
    %v237 = vpop.f32.mrf.mxu0
    %v238 = vadd.f32 0.0, %v237
    %239 = vmatmul.f32.gmra.mxu0 %v107
    %v240 = vpop.f32.mrf.mxu0
    %v241 = vadd.f32 0.0, %v240
    %242 = vmatmul.f32.gmra.mxu0 %v108
    %v243 = vpop.f32.mrf.mxu0
    %v244 = vadd.f32 0.0, %v243
    %245 = vmatmul.f32.gmra.mxu0 %v109
    %v246 = vpop.f32.mrf.mxu0
    %v247 = vadd.f32 0.0, %v246
    %248 = vmatmul.f32.gmra.mxu0 %v110
    %v249 = vpop.f32.mrf.mxu0
    %v250 = vadd.f32 0.0, %v249
    %251 = vmatmul.f32.gmra.mxu0 %v111
    %v252 = vpop.f32.mrf.mxu0
    %v253 = vadd.f32 0.0, %v252
    %254 = vmatmul.f32.gmra.mxu0 %v112
    %v255 = vpop.f32.mrf.mxu0
    %v256 = vadd.f32 0.0, %v255
    %257 = vdwg.mxu0
    %258 = vmatpush.msra.mxu0 %v144
    %259 = vmatpush.msra.mxu0 %v142
    %260 = vmatpush.msra.mxu0 %v140
    %261 = vmatpush.msra.mxu0 %v138
    %262 = vmatpush.msra.mxu0 %v136
    %263 = vmatpush.msra.mxu0 %v134
    %264 = vmatpush.msra.mxu0 %v132
    %265 = vmatpush.msra.mxu0 %v130
    %266 = vmatpush.msra.mxu0 %v128
    %267 = vmatpush.msra.mxu0 %v126
    %268 = vmatpush.msra.mxu0 %v124
    %269 = vmatpush.msra.mxu0 %v122
    %270 = vmatpush.msra.mxu0 %v120
    %271 = vmatpush.msra.mxu0 %v118
    %272 = vmatpush.msra.mxu0 %v116
    %273 = vmatpush.msra.mxu0 %v114
    %274 = vmatmul.f32.gmra.mxu0 %v81
    %v275 = vpop.f32.mrf.mxu0
    %v276 = vadd.f32 0.0, %v275
    %277 = vmatmul.f32.gmra.mxu0 %v82
    %v278 = vpop.f32.mrf.mxu0
    %v279 = vadd.f32 0.0, %v278
    %280 = vmatmul.f32.gmra.mxu0 %v83
    %v281 = vpop.f32.mrf.mxu0
    %v282 = vadd.f32 0.0, %v281
    %283 = vmatmul.f32.gmra.mxu0 %v84
    %v284 = vpop.f32.mrf.mxu0
    %v285 = vadd.f32 0.0, %v284
    %286 = vmatmul.f32.gmra.mxu0 %v85
    %v287 = vpop.f32.mrf.mxu0
    %v288 = vadd.f32 0.0, %v287
    %289 = vmatmul.f32.gmra.mxu0 %v86
    %v290 = vpop.f32.mrf.mxu0
    %v291 = vadd.f32 0.0, %v290
    %292 = vmatmul.f32.gmra.mxu0 %v87
    %v293 = vpop.f32.mrf.mxu0
    %v294 = vadd.f32 0.0, %v293
    %295 = vmatmul.f32.gmra.mxu0 %v88
    %v296 = vpop.f32.mrf.mxu0
    %v297 = vadd.f32 0.0, %v296
    %298 = vmatmul.f32.gmra.mxu0 %v89
    %v299 = vpop.f32.mrf.mxu0
    %v300 = vadd.f32 0.0, %v299
    %301 = vmatmul.f32.gmra.mxu0 %v90
    %v302 = vpop.f32.mrf.mxu0
    %v303 = vadd.f32 0.0, %v302
    %304 = vmatmul.f32.gmra.mxu0 %v91
    %v305 = vpop.f32.mrf.mxu0
    %v306 = vadd.f32 0.0, %v305
    %307 = vmatmul.f32.gmra.mxu0 %v92
    %v308 = vpop.f32.mrf.mxu0
    %v309 = vadd.f32 0.0, %v308
    %310 = vmatmul.f32.gmra.mxu0 %v93
    %v311 = vpop.f32.mrf.mxu0
    %v312 = vadd.f32 0.0, %v311
    %313 = vmatmul.f32.gmra.mxu0 %v94
    %v314 = vpop.f32.mrf.mxu0
    %v315 = vadd.f32 0.0, %v314
    %316 = vmatmul.f32.gmra.mxu0 %v95
    %v317 = vpop.f32.mrf.mxu0
    %v318 = vadd.f32 0.0, %v317
    %319 = vmatmul.f32.gmra.mxu0 %v96
    %v320 = vpop.f32.mrf.mxu0
    %v321 = vadd.f32 0.0, %v320
    %322 = vmatmul.f32.gmra.mxu0 %v97
    %v323 = vpop.f32.mrf.mxu0
    %v324 = vadd.f32 0.0, %v323
    %325 = vmatmul.f32.gmra.mxu0 %v98
    %v326 = vpop.f32.mrf.mxu0
    %v327 = vadd.f32 0.0, %v326
    %328 = vmatmul.f32.gmra.mxu0 %v99
    %v329 = vpop.f32.mrf.mxu0
    %v330 = vadd.f32 0.0, %v329
    %331 = vmatmul.f32.gmra.mxu0 %v100
    %v332 = vpop.f32.mrf.mxu0
    %v333 = vadd.f32 0.0, %v332
    %334 = vmatmul.f32.gmra.mxu0 %v101
    %v335 = vpop.f32.mrf.mxu0
    %v336 = vadd.f32 0.0, %v335
    %337 = vmatmul.f32.gmra.mxu0 %v102
    %v338 = vpop.f32.mrf.mxu0
    %v339 = vadd.f32 0.0, %v338
    %340 = vmatmul.f32.gmra.mxu0 %v103
    %v341 = vpop.f32.mrf.mxu0
    %v342 = vadd.f32 0.0, %v341
    %343 = vmatmul.f32.gmra.mxu0 %v104
    %v344 = vpop.f32.mrf.mxu0
    %v345 = vadd.f32 0.0, %v344
    %346 = vmatmul.f32.gmra.mxu0 %v105
    %v347 = vpop.f32.mrf.mxu0
    %v348 = vadd.f32 0.0, %v347
    %349 = vmatmul.f32.gmra.mxu0 %v106
    %v350 = vpop.f32.mrf.mxu0
    %v351 = vadd.f32 0.0, %v350
    %352 = vmatmul.f32.gmra.mxu0 %v107
    %v353 = vpop.f32.mrf.mxu0
    %v354 = vadd.f32 0.0, %v353
    %355 = vmatmul.f32.gmra.mxu0 %v108
    %v356 = vpop.f32.mrf.mxu0
    %v357 = vadd.f32 0.0, %v356
    %358 = vmatmul.f32.gmra.mxu0 %v109
    %v359 = vpop.f32.mrf.mxu0
    %v360 = vadd.f32 0.0, %v359
    %361 = vmatmul.f32.gmra.mxu0 %v110
    %v362 = vpop.f32.mrf.mxu0
    %v363 = vadd.f32 0.0, %v362
    %364 = vmatmul.f32.gmra.mxu0 %v111
    %v365 = vpop.f32.mrf.mxu0
    %v366 = vadd.f32 0.0, %v365
    %367 = vmatmul.f32.gmra.mxu0 %v112
    %v368 = vpop.f32.mrf.mxu0
    %v369 = vadd.f32 0.0, %v368
    %370 = vdwg.mxu0
    %v371 = vmax.f32 %v163, 0.0
    %v372 = vmax.f32 %v276, 0.0
    %v373 = vmax.f32 %v166, 0.0
    %v374 = vmax.f32 %v279, 0.0
    %v375 = vmax.f32 %v169, 0.0
    %v376 = vmax.f32 %v282, 0.0
    %v377 = vmax.f32 %v172, 0.0
    %v378 = vmax.f32 %v285, 0.0
    %v379 = vmax.f32 %v175, 0.0
    %v380 = vmax.f32 %v288, 0.0
    %v381 = vmax.f32 %v178, 0.0
    %v382 = vmax.f32 %v291, 0.0
    %v383 = vmax.f32 %v181, 0.0
    %v384 = vmax.f32 %v294, 0.0
    %v385 = vmax.f32 %v184, 0.0
    %v386 = vmax.f32 %v297, 0.0
    %v387 = vmax.f32 %v187, 0.0
    %v388 = vmax.f32 %v300, 0.0
    %v389 = vmax.f32 %v190, 0.0
    %v390 = vmax.f32 %v303, 0.0
    %v391 = vmax.f32 %v193, 0.0
    %v392 = vmax.f32 %v306, 0.0
    %v393 = vmax.f32 %v196, 0.0
    %v394 = vmax.f32 %v309, 0.0
    %v395 = vmax.f32 %v199, 0.0
    %v396 = vmax.f32 %v312, 0.0
    %v397 = vmax.f32 %v202, 0.0
    %v398 = vmax.f32 %v315, 0.0
    %v399 = vmax.f32 %v205, 0.0
    %v400 = vmax.f32 %v318, 0.0
    %v401 = vmax.f32 %v208, 0.0
    %v402 = vmax.f32 %v321, 0.0
    %v403 = vmax.f32 %v211, 0.0
    %v404 = vmax.f32 %v324, 0.0
    %v405 = vmax.f32 %v214, 0.0
    %v406 = vmax.f32 %v327, 0.0
    %v407 = vmax.f32 %v217, 0.0
    %v408 = vmax.f32 %v330, 0.0
    %v409 = vmax.f32 %v220, 0.0
    %v410 = vmax.f32 %v333, 0.0
    %v411 = vmax.f32 %v223, 0.0
    %v412 = vmax.f32 %v336, 0.0
    %v413 = vmax.f32 %v226, 0.0
    %v414 = vmax.f32 %v339, 0.0
    %v415 = vmax.f32 %v229, 0.0
    %v416 = vmax.f32 %v342, 0.0
    %v417 = vmax.f32 %v232, 0.0
    %v418 = vmax.f32 %v345, 0.0
    %v419 = vmax.f32 %v235, 0.0
    %v420 = vmax.f32 %v348, 0.0
    %v421 = vmax.f32 %v238, 0.0
    %v422 = vmax.f32 %v351, 0.0
    %v423 = vmax.f32 %v241, 0.0
    %v424 = vmax.f32 %v354, 0.0
    %v425 = vmax.f32 %v244, 0.0
    %v426 = vmax.f32 %v357, 0.0
    %v427 = vmax.f32 %v247, 0.0
    %v428 = vmax.f32 %v360, 0.0
    %v429 = vmax.f32 %v250, 0.0
    %v430 = vmax.f32 %v363, 0.0
    %v431 = vmax.f32 %v253, 0.0
    %v432 = vmax.f32 %v366, 0.0
    %v433 = vmax.f32 %v256, 0.0
    %v434 = vmax.f32 %v369, 0.0
    %v435 = vld [vmem:[#allocation7] sm:$0xff]
    %v436 = vld [vmem:[#allocation7 + $0x8] sm:$0xff]
    %v437 = vld [vmem:[#allocation7 + $0x10] sm:$0xff]
    %v438 = vld [vmem:[#allocation7 + $0x18] sm:$0xff]
    %v439 = vld [vmem:[#allocation7 + $0x20] sm:$0xff]
    %v440 = vld [vmem:[#allocation7 + $0x28] sm:$0xff]
    %v441 = vld [vmem:[#allocation7 + $0x30] sm:$0xff]
    %v442 = vld [vmem:[#allocation7 + $0x38] sm:$0xff]
    %v443 = vld [vmem:[#allocation7 + $0x40] sm:$0xff]
    %v444 = vld [vmem:[#allocation7 + $0x48] sm:$0xff]
    %v445 = vld [vmem:[#allocation7 + $0x50] sm:$0xff]
    %v446 = vld [vmem:[#allocation7 + $0x58] sm:$0xff]
    %v447 = vld [vmem:[#allocation7 + $0x60] sm:$0xff]
    %v448 = vld [vmem:[#allocation7 + $0x68] sm:$0xff]
    %v449 = vld [vmem:[#allocation7 + $0x70] sm:$0xff]
    %v450 = vld [vmem:[#allocation7 + $0x78] sm:$0xff]
    %v451 = vld [vmem:[#allocation7 + $0x80] sm:$0xff]
    %v452 = vld [vmem:[#allocation7 + $0x88] sm:$0xff]
    %v453 = vld [vmem:[#allocation7 + $0x90] sm:$0xff]
    %v454 = vld [vmem:[#allocation7 + $0x98] sm:$0xff]
    %v455 = vld [vmem:[#allocation7 + $0xa0] sm:$0xff]
    %v456 = vld [vmem:[#allocation7 + $0xa8] sm:$0xff]
    %v457 = vld [vmem:[#allocation7 + $0xb0] sm:$0xff]
    %v458 = vld [vmem:[#allocation7 + $0xb8] sm:$0xff]
    %v459 = vld [vmem:[#allocation7 + $0xc0] sm:$0xff]
    %v460 = vld [vmem:[#allocation7 + $0xc8] sm:$0xff]
    %v461 = vld [vmem:[#allocation7 + $0xd0] sm:$0xff]
    %v462 = vld [vmem:[#allocation7 + $0xd8] sm:$0xff]
    %v463 = vld [vmem:[#allocation7 + $0xe0] sm:$0xff]
    %v464 = vld [vmem:[#allocation7 + $0xe8] sm:$0xff]
    %v465 = vld [vmem:[#allocation7 + $0xf0] sm:$0xff]
    %v466 = vld [vmem:[#allocation7 + $0xf8] sm:$0xff]
    %v467 = vld [vmem:[#allocation7 + $0x100] sm:$0xff]
    %v468 = vld [vmem:[#allocation7 + $0x108] sm:$0xff]
    %v469 = vld [vmem:[#allocation7 + $0x110] sm:$0xff]
    %v470 = vld [vmem:[#allocation7 + $0x118] sm:$0xff]
    %v471 = vld [vmem:[#allocation7 + $0x120] sm:$0xff]
    %v472 = vld [vmem:[#allocation7 + $0x128] sm:$0xff]
    %v473 = vld [vmem:[#allocation7 + $0x130] sm:$0xff]
    %v474 = vld [vmem:[#allocation7 + $0x138] sm:$0xff]
    %v475 = vld [vmem:[#allocation7 + $0x140] sm:$0xff]
    %v476 = vld [vmem:[#allocation7 + $0x148] sm:$0xff]
    %v477 = vld [vmem:[#allocation7 + $0x150] sm:$0xff]
    %v478 = vld [vmem:[#allocation7 + $0x158] sm:$0xff]
    %v479 = vld [vmem:[#allocation7 + $0x160] sm:$0xff]
    %v480 = vld [vmem:[#allocation7 + $0x168] sm:$0xff]
    %v481 = vld [vmem:[#allocation7 + $0x170] sm:$0xff]
    %v482 = vld [vmem:[#allocation7 + $0x178] sm:$0xff]
    %v483 = vld [vmem:[#allocation7 + $0x180] sm:$0xff]
    %v484 = vld [vmem:[#allocation7 + $0x188] sm:$0xff]
    %v485 = vld [vmem:[#allocation7 + $0x190] sm:$0xff]
    %v486 = vld [vmem:[#allocation7 + $0x198] sm:$0xff]
    %v487 = vld [vmem:[#allocation7 + $0x1a0] sm:$0xff]
    %v488 = vld [vmem:[#allocation7 + $0x1a8] sm:$0xff]
    %v489 = vld [vmem:[#allocation7 + $0x1b0] sm:$0xff]
    %v490 = vld [vmem:[#allocation7 + $0x1b8] sm:$0xff]
    %v491 = vld [vmem:[#allocation7 + $0x1c0] sm:$0xff]
    %v492 = vld [vmem:[#allocation7 + $0x1c8] sm:$0xff]
    %v493 = vld [vmem:[#allocation7 + $0x1d0] sm:$0xff]
    %v494 = vld [vmem:[#allocation7 + $0x1d8] sm:$0xff]
    %v495 = vld [vmem:[#allocation7 + $0x1e0] sm:$0xff]
    %v496 = vld [vmem:[#allocation7 + $0x1e8] sm:$0xff]
    %v497 = vld [vmem:[#allocation7 + $0x1f0] sm:$0xff]
    %v498 = vld [vmem:[#allocation7 + $0x1f8] sm:$0xff]
    %499 = vmatpush.msra.mxu0 %v465
    %500 = vmatpush.msra.mxu0 %v463
    %501 = vmatpush.msra.mxu0 %v461
    %502 = vmatpush.msra.mxu0 %v459
    %503 = vmatpush.msra.mxu0 %v457
    %504 = vmatpush.msra.mxu0 %v455
    %505 = vmatpush.msra.mxu0 %v453
    %506 = vmatpush.msra.mxu0 %v451
    %507 = vmatpush.msra.mxu0 %v449
    %508 = vmatpush.msra.mxu0 %v447
    %509 = vmatpush.msra.mxu0 %v445
    %510 = vmatpush.msra.mxu0 %v443
    %511 = vmatpush.msra.mxu0 %v441
    %512 = vmatpush.msra.mxu0 %v439
    %513 = vmatpush.msra.mxu0 %v437
    %514 = vmatpush.msra.mxu0 %v435
    %515 = vmatmul.f32.gmra.mxu0 %v371
    %v516 = vpop.f32.mrf.mxu0
    %v517 = vadd.f32 0.0, %v516
    %518 = vmatmul.f32.gmra.mxu0 %v373
    %v519 = vpop.f32.mrf.mxu0
    %v520 = vadd.f32 0.0, %v519
    %521 = vmatmul.f32.gmra.mxu0 %v375
    %v522 = vpop.f32.mrf.mxu0
    %v523 = vadd.f32 0.0, %v522
    %524 = vmatmul.f32.gmra.mxu0 %v377
    %v525 = vpop.f32.mrf.mxu0
    %v526 = vadd.f32 0.0, %v525
    %527 = vmatmul.f32.gmra.mxu0 %v379
    %v528 = vpop.f32.mrf.mxu0
    %v529 = vadd.f32 0.0, %v528
    %530 = vmatmul.f32.gmra.mxu0 %v381
    %v531 = vpop.f32.mrf.mxu0
    %v532 = vadd.f32 0.0, %v531
    %533 = vmatmul.f32.gmra.mxu0 %v383
    %v534 = vpop.f32.mrf.mxu0
    %v535 = vadd.f32 0.0, %v534
    %536 = vmatmul.f32.gmra.mxu0 %v385
    %v537 = vpop.f32.mrf.mxu0
    %v538 = vadd.f32 0.0, %v537
    %539 = vmatmul.f32.gmra.mxu0 %v387
    %v540 = vpop.f32.mrf.mxu0
    %v541 = vadd.f32 0.0, %v540
    %542 = vmatmul.f32.gmra.mxu0 %v389
    %v543 = vpop.f32.mrf.mxu0
    %v544 = vadd.f32 0.0, %v543
    %545 = vmatmul.f32.gmra.mxu0 %v391
    %v546 = vpop.f32.mrf.mxu0
    %v547 = vadd.f32 0.0, %v546
    %548 = vmatmul.f32.gmra.mxu0 %v393
    %v549 = vpop.f32.mrf.mxu0
    %v550 = vadd.f32 0.0, %v549
    %551 = vmatmul.f32.gmra.mxu0 %v395
    %v552 = vpop.f32.mrf.mxu0
    %v553 = vadd.f32 0.0, %v552
    %554 = vmatmul.f32.gmra.mxu0 %v397
    %v555 = vpop.f32.mrf.mxu0
    %v556 = vadd.f32 0.0, %v555
    %557 = vmatmul.f32.gmra.mxu0 %v399
    %v558 = vpop.f32.mrf.mxu0
    %v559 = vadd.f32 0.0, %v558
    %560 = vmatmul.f32.gmra.mxu0 %v401
    %v561 = vpop.f32.mrf.mxu0
    %v562 = vadd.f32 0.0, %v561
    %563 = vmatmul.f32.gmra.mxu0 %v403
    %v564 = vpop.f32.mrf.mxu0
    %v565 = vadd.f32 0.0, %v564
    %566 = vmatmul.f32.gmra.mxu0 %v405
    %v567 = vpop.f32.mrf.mxu0
    %v568 = vadd.f32 0.0, %v567
    %569 = vmatmul.f32.gmra.mxu0 %v407
    %v570 = vpop.f32.mrf.mxu0
    %v571 = vadd.f32 0.0, %v570
    %572 = vmatmul.f32.gmra.mxu0 %v409
    %v573 = vpop.f32.mrf.mxu0
    %v574 = vadd.f32 0.0, %v573
    %575 = vmatmul.f32.gmra.mxu0 %v411
    %v576 = vpop.f32.mrf.mxu0
    %v577 = vadd.f32 0.0, %v576
    %578 = vmatmul.f32.gmra.mxu0 %v413
    %v579 = vpop.f32.mrf.mxu0
    %v580 = vadd.f32 0.0, %v579
    %581 = vmatmul.f32.gmra.mxu0 %v415
    %v582 = vpop.f32.mrf.mxu0
    %v583 = vadd.f32 0.0, %v582
    %584 = vmatmul.f32.gmra.mxu0 %v417
    %v585 = vpop.f32.mrf.mxu0
    %v586 = vadd.f32 0.0, %v585
    %587 = vmatmul.f32.gmra.mxu0 %v419
    %v588 = vpop.f32.mrf.mxu0
    %v589 = vadd.f32 0.0, %v588
    %590 = vmatmul.f32.gmra.mxu0 %v421
    %v591 = vpop.f32.mrf.mxu0
    %v592 = vadd.f32 0.0, %v591
    %593 = vmatmul.f32.gmra.mxu0 %v423
    %v594 = vpop.f32.mrf.mxu0
    %v595 = vadd.f32 0.0, %v594
    %596 = vmatmul.f32.gmra.mxu0 %v425
    %v597 = vpop.f32.mrf.mxu0
    %v598 = vadd.f32 0.0, %v597
    %599 = vmatmul.f32.gmra.mxu0 %v427
    %v600 = vpop.f32.mrf.mxu0
    %v601 = vadd.f32 0.0, %v600
    %602 = vmatmul.f32.gmra.mxu0 %v429
    %v603 = vpop.f32.mrf.mxu0
    %v604 = vadd.f32 0.0, %v603
    %605 = vmatmul.f32.gmra.mxu0 %v431
    %v606 = vpop.f32.mrf.mxu0
    %v607 = vadd.f32 0.0, %v606
    %608 = vmatmul.f32.gmra.mxu0 %v433
    %v609 = vpop.f32.mrf.mxu0
    %v610 = vadd.f32 0.0, %v609
    %611 = vdwg.mxu0
    %612 = vmatpush.msra.mxu0 %v497
    %613 = vmatpush.msra.mxu0 %v495
    %614 = vmatpush.msra.mxu0 %v493
    %615 = vmatpush.msra.mxu0 %v491
    %616 = vmatpush.msra.mxu0 %v489
    %617 = vmatpush.msra.mxu0 %v487
    %618 = vmatpush.msra.mxu0 %v485
    %619 = vmatpush.msra.mxu0 %v483
    %620 = vmatpush.msra.mxu0 %v481
    %621 = vmatpush.msra.mxu0 %v479
    %622 = vmatpush.msra.mxu0 %v477
    %623 = vmatpush.msra.mxu0 %v475
    %624 = vmatpush.msra.mxu0 %v473
    %625 = vmatpush.msra.mxu0 %v471
    %626 = vmatpush.msra.mxu0 %v469
    %627 = vmatpush.msra.mxu0 %v467
    %628 = vmatmul.f32.gmra.mxu0 %v372
    %v629 = vpop.f32.mrf.mxu0
    %v630 = vadd.f32 %v517, %v629
    %631 = vmatmul.f32.gmra.mxu0 %v374
    %v632 = vpop.f32.mrf.mxu0
    %v633 = vadd.f32 %v520, %v632
    %634 = vmatmul.f32.gmra.mxu0 %v376
    %v635 = vpop.f32.mrf.mxu0
    %v636 = vadd.f32 %v523, %v635
    %637 = vmatmul.f32.gmra.mxu0 %v378
    %v638 = vpop.f32.mrf.mxu0
    %v639 = vadd.f32 %v526, %v638
    %640 = vmatmul.f32.gmra.mxu0 %v380
    %v641 = vpop.f32.mrf.mxu0
    %v642 = vadd.f32 %v529, %v641
    %643 = vmatmul.f32.gmra.mxu0 %v382
    %v644 = vpop.f32.mrf.mxu0
    %v645 = vadd.f32 %v532, %v644
    %646 = vmatmul.f32.gmra.mxu0 %v384
    %v647 = vpop.f32.mrf.mxu0
    %v648 = vadd.f32 %v535, %v647
    %649 = vmatmul.f32.gmra.mxu0 %v386
    %v650 = vpop.f32.mrf.mxu0
    %v651 = vadd.f32 %v538, %v650
    %652 = vmatmul.f32.gmra.mxu0 %v388
    %v653 = vpop.f32.mrf.mxu0
    %v654 = vadd.f32 %v541, %v653
    %655 = vmatmul.f32.gmra.mxu0 %v390
    %v656 = vpop.f32.mrf.mxu0
    %v657 = vadd.f32 %v544, %v656
    %658 = vmatmul.f32.gmra.mxu0 %v392
    %v659 = vpop.f32.mrf.mxu0
    %v660 = vadd.f32 %v547, %v659
    %661 = vmatmul.f32.gmra.mxu0 %v394
    %v662 = vpop.f32.mrf.mxu0
    %v663 = vadd.f32 %v550, %v662
    %664 = vmatmul.f32.gmra.mxu0 %v396
    %v665 = vpop.f32.mrf.mxu0
    %v666 = vadd.f32 %v553, %v665
    %667 = vmatmul.f32.gmra.mxu0 %v398
    %v668 = vpop.f32.mrf.mxu0
    %v669 = vadd.f32 %v556, %v668
    %670 = vmatmul.f32.gmra.mxu0 %v400
    %v671 = vpop.f32.mrf.mxu0
    %v672 = vadd.f32 %v559, %v671
    %673 = vmatmul.f32.gmra.mxu0 %v402
    %v674 = vpop.f32.mrf.mxu0
    %v675 = vadd.f32 %v562, %v674
    %676 = vmatmul.f32.gmra.mxu0 %v404
    %v677 = vpop.f32.mrf.mxu0
    %v678 = vadd.f32 %v565, %v677
    %679 = vmatmul.f32.gmra.mxu0 %v406
    %v680 = vpop.f32.mrf.mxu0
    %v681 = vadd.f32 %v568, %v680
    %682 = vmatmul.f32.gmra.mxu0 %v408
    %v683 = vpop.f32.mrf.mxu0
    %v684 = vadd.f32 %v571, %v683
    %685 = vmatmul.f32.gmra.mxu0 %v410
    %v686 = vpop.f32.mrf.mxu0
    %v687 = vadd.f32 %v574, %v686
    %688 = vmatmul.f32.gmra.mxu0 %v412
    %v689 = vpop.f32.mrf.mxu0
    %v690 = vadd.f32 %v577, %v689
    %691 = vmatmul.f32.gmra.mxu0 %v414
    %v692 = vpop.f32.mrf.mxu0
    %v693 = vadd.f32 %v580, %v692
    %694 = vmatmul.f32.gmra.mxu0 %v416
    %v695 = vpop.f32.mrf.mxu0
    %v696 = vadd.f32 %v583, %v695
    %697 = vmatmul.f32.gmra.mxu0 %v418
    %v698 = vpop.f32.mrf.mxu0
    %v699 = vadd.f32 %v586, %v698
    %700 = vmatmul.f32.gmra.mxu0 %v420
    %v701 = vpop.f32.mrf.mxu0
    %v702 = vadd.f32 %v589, %v701
    %703 = vmatmul.f32.gmra.mxu0 %v422
    %v704 = vpop.f32.mrf.mxu0
    %v705 = vadd.f32 %v592, %v704
    %706 = vmatmul.f32.gmra.mxu0 %v424
    %v707 = vpop.f32.mrf.mxu0
    %v708 = vadd.f32 %v595, %v707
    %709 = vmatmul.f32.gmra.mxu0 %v426
    %v710 = vpop.f32.mrf.mxu0
    %v711 = vadd.f32 %v598, %v710
    %712 = vmatmul.f32.gmra.mxu0 %v428
    %v713 = vpop.f32.mrf.mxu0
    %v714 = vadd.f32 %v601, %v713
    %715 = vmatmul.f32.gmra.mxu0 %v430
    %v716 = vpop.f32.mrf.mxu0
    %v717 = vadd.f32 %v604, %v716
    %718 = vmatmul.f32.gmra.mxu0 %v432
    %v719 = vpop.f32.mrf.mxu0
    %v720 = vadd.f32 %v607, %v719
    %721 = vmatmul.f32.gmra.mxu0 %v434
    %v722 = vpop.f32.mrf.mxu0
    %v723 = vadd.f32 %v610, %v722
    %724 = vdwg.mxu0
    %725 = vmatpush.msra.mxu0 %v466
    %726 = vmatpush.msra.mxu0 %v464
    %727 = vmatpush.msra.mxu0 %v462
    %728 = vmatpush.msra.mxu0 %v460
    %729 = vmatpush.msra.mxu0 %v458
    %730 = vmatpush.msra.mxu0 %v456
    %731 = vmatpush.msra.mxu0 %v454
    %732 = vmatpush.msra.mxu0 %v452
    %733 = vmatpush.msra.mxu0 %v450
    %734 = vmatpush.msra.mxu0 %v448
    %735 = vmatpush.msra.mxu0 %v446
    %736 = vmatpush.msra.mxu0 %v444
    %737 = vmatpush.msra.mxu0 %v442
    %738 = vmatpush.msra.mxu0 %v440
    %739 = vmatpush.msra.mxu0 %v438
    %740 = vmatpush.msra.mxu0 %v436
    %741 = vmatmul.f32.gmra.mxu0 %v371
    %v742 = vpop.f32.mrf.mxu0
    %v743 = vadd.f32 0.0, %v742
    %744 = vmatmul.f32.gmra.mxu0 %v373
    %v745 = vpop.f32.mrf.mxu0
    %v746 = vadd.f32 0.0, %v745
    %747 = vmatmul.f32.gmra.mxu0 %v375
    %v748 = vpop.f32.mrf.mxu0
    %v749 = vadd.f32 0.0, %v748
    %750 = vmatmul.f32.gmra.mxu0 %v377
    %v751 = vpop.f32.mrf.mxu0
    %v752 = vadd.f32 0.0, %v751
    %753 = vmatmul.f32.gmra.mxu0 %v379
    %v754 = vpop.f32.mrf.mxu0
    %v755 = vadd.f32 0.0, %v754
    %756 = vmatmul.f32.gmra.mxu0 %v381
    %v757 = vpop.f32.mrf.mxu0
    %v758 = vadd.f32 0.0, %v757
    %759 = vmatmul.f32.gmra.mxu0 %v383
    %v760 = vpop.f32.mrf.mxu0
    %v761 = vadd.f32 0.0, %v760
    %762 = vmatmul.f32.gmra.mxu0 %v385
    %v763 = vpop.f32.mrf.mxu0
    %v764 = vadd.f32 0.0, %v763
    %765 = vmatmul.f32.gmra.mxu0 %v387
    %v766 = vpop.f32.mrf.mxu0
    %v767 = vadd.f32 0.0, %v766
    %768 = vmatmul.f32.gmra.mxu0 %v389
    %v769 = vpop.f32.mrf.mxu0
    %v770 = vadd.f32 0.0, %v769
    %771 = vmatmul.f32.gmra.mxu0 %v391
    %v772 = vpop.f32.mrf.mxu0
    %v773 = vadd.f32 0.0, %v772
    %774 = vmatmul.f32.gmra.mxu0 %v393
    %v775 = vpop.f32.mrf.mxu0
    %v776 = vadd.f32 0.0, %v775
    %777 = vmatmul.f32.gmra.mxu0 %v395
    %v778 = vpop.f32.mrf.mxu0
    %v779 = vadd.f32 0.0, %v778
    %780 = vmatmul.f32.gmra.mxu0 %v397
    %v781 = vpop.f32.mrf.mxu0
    %v782 = vadd.f32 0.0, %v781
    %783 = vmatmul.f32.gmra.mxu0 %v399
    %v784 = vpop.f32.mrf.mxu0
    %v785 = vadd.f32 0.0, %v784
    %786 = vmatmul.f32.gmra.mxu0 %v401
    %v787 = vpop.f32.mrf.mxu0
    %v788 = vadd.f32 0.0, %v787
    %789 = vmatmul.f32.gmra.mxu0 %v403
    %v790 = vpop.f32.mrf.mxu0
    %v791 = vadd.f32 0.0, %v790
    %792 = vmatmul.f32.gmra.mxu0 %v405
    %v793 = vpop.f32.mrf.mxu0
    %v794 = vadd.f32 0.0, %v793
    %795 = vmatmul.f32.gmra.mxu0 %v407
    %v796 = vpop.f32.mrf.mxu0
    %v797 = vadd.f32 0.0, %v796
    %798 = vmatmul.f32.gmra.mxu0 %v409
    %v799 = vpop.f32.mrf.mxu0
    %v800 = vadd.f32 0.0, %v799
    %801 = vmatmul.f32.gmra.mxu0 %v411
    %v802 = vpop.f32.mrf.mxu0
    %v803 = vadd.f32 0.0, %v802
    %804 = vmatmul.f32.gmra.mxu0 %v413
    %v805 = vpop.f32.mrf.mxu0
    %v806 = vadd.f32 0.0, %v805
    %807 = vmatmul.f32.gmra.mxu0 %v415
    %v808 = vpop.f32.mrf.mxu0
    %v809 = vadd.f32 0.0, %v808
    %810 = vmatmul.f32.gmra.mxu0 %v417
    %v811 = vpop.f32.mrf.mxu0
    %v812 = vadd.f32 0.0, %v811
    %813 = vmatmul.f32.gmra.mxu0 %v419
    %v814 = vpop.f32.mrf.mxu0
    %v815 = vadd.f32 0.0, %v814
    %816 = vmatmul.f32.gmra.mxu0 %v421
    %v817 = vpop.f32.mrf.mxu0
    %v818 = vadd.f32 0.0, %v817
    %819 = vmatmul.f32.gmra.mxu0 %v423
    %v820 = vpop.f32.mrf.mxu0
    %v821 = vadd.f32 0.0, %v820
    %822 = vmatmul.f32.gmra.mxu0 %v425
    %v823 = vpop.f32.mrf.mxu0
    %v824 = vadd.f32 0.0, %v823
    %825 = vmatmul.f32.gmra.mxu0 %v427
    %v826 = vpop.f32.mrf.mxu0
    %v827 = vadd.f32 0.0, %v826
    %828 = vmatmul.f32.gmra.mxu0 %v429
    %v829 = vpop.f32.mrf.mxu0
    %v830 = vadd.f32 0.0, %v829
    %831 = vmatmul.f32.gmra.mxu0 %v431
    %v832 = vpop.f32.mrf.mxu0
    %v833 = vadd.f32 0.0, %v832
    %834 = vmatmul.f32.gmra.mxu0 %v433
    %v835 = vpop.f32.mrf.mxu0
    %v836 = vadd.f32 0.0, %v835
    %837 = vdwg.mxu0
    %838 = vmatpush.msra.mxu0 %v498
    %839 = vmatpush.msra.mxu0 %v496
    %840 = vmatpush.msra.mxu0 %v494
    %841 = vmatpush.msra.mxu0 %v492
    %842 = vmatpush.msra.mxu0 %v490
    %843 = vmatpush.msra.mxu0 %v488
    %844 = vmatpush.msra.mxu0 %v486
    %845 = vmatpush.msra.mxu0 %v484
    %846 = vmatpush.msra.mxu0 %v482
    %847 = vmatpush.msra.mxu0 %v480
    %848 = vmatpush.msra.mxu0 %v478
    %849 = vmatpush.msra.mxu0 %v476
    %850 = vmatpush.msra.mxu0 %v474
    %851 = vmatpush.msra.mxu0 %v472
    %852 = vmatpush.msra.mxu0 %v470
    %853 = vmatpush.msra.mxu0 %v468
    %854 = vmatmul.f32.gmra.mxu0 %v372
    %v855 = vpop.f32.mrf.mxu0
    %v856 = vadd.f32 %v743, %v855
    %857 = vmatmul.f32.gmra.mxu0 %v374
    %v858 = vpop.f32.mrf.mxu0
    %v859 = vadd.f32 %v746, %v858
    %860 = vmatmul.f32.gmra.mxu0 %v376
    %v861 = vpop.f32.mrf.mxu0
    %v862 = vadd.f32 %v749, %v861
    %863 = vmatmul.f32.gmra.mxu0 %v378
    %v864 = vpop.f32.mrf.mxu0
    %v865 = vadd.f32 %v752, %v864
    %866 = vmatmul.f32.gmra.mxu0 %v380
    %v867 = vpop.f32.mrf.mxu0
    %v868 = vadd.f32 %v755, %v867
    %869 = vmatmul.f32.gmra.mxu0 %v382
    %v870 = vpop.f32.mrf.mxu0
    %v871 = vadd.f32 %v758, %v870
    %872 = vmatmul.f32.gmra.mxu0 %v384
    %v873 = vpop.f32.mrf.mxu0
    %v874 = vadd.f32 %v761, %v873
    %875 = vmatmul.f32.gmra.mxu0 %v386
    %v876 = vpop.f32.mrf.mxu0
    %v877 = vadd.f32 %v764, %v876
    %878 = vmatmul.f32.gmra.mxu0 %v388
    %v879 = vpop.f32.mrf.mxu0
    %v880 = vadd.f32 %v767, %v879
    %881 = vmatmul.f32.gmra.mxu0 %v390
    %v882 = vpop.f32.mrf.mxu0
    %v883 = vadd.f32 %v770, %v882
    %884 = vmatmul.f32.gmra.mxu0 %v392
    %v885 = vpop.f32.mrf.mxu0
    %v886 = vadd.f32 %v773, %v885
    %887 = vmatmul.f32.gmra.mxu0 %v394
    %v888 = vpop.f32.mrf.mxu0
    %v889 = vadd.f32 %v776, %v888
    %890 = vmatmul.f32.gmra.mxu0 %v396
    %v891 = vpop.f32.mrf.mxu0
    %v892 = vadd.f32 %v779, %v891
    %893 = vmatmul.f32.gmra.mxu0 %v398
    %v894 = vpop.f32.mrf.mxu0
    %v895 = vadd.f32 %v782, %v894
    %896 = vmatmul.f32.gmra.mxu0 %v400
    %v897 = vpop.f32.mrf.mxu0
    %v898 = vadd.f32 %v785, %v897
    %899 = vmatmul.f32.gmra.mxu0 %v402
    %v900 = vpop.f32.mrf.mxu0
    %v901 = vadd.f32 %v788, %v900
    %902 = vmatmul.f32.gmra.mxu0 %v404
    %v903 = vpop.f32.mrf.mxu0
    %v904 = vadd.f32 %v791, %v903
    %905 = vmatmul.f32.gmra.mxu0 %v406
    %v906 = vpop.f32.mrf.mxu0
    %v907 = vadd.f32 %v794, %v906
    %908 = vmatmul.f32.gmra.mxu0 %v408
    %v909 = vpop.f32.mrf.mxu0
    %v910 = vadd.f32 %v797, %v909
    %911 = vmatmul.f32.gmra.mxu0 %v410
    %v912 = vpop.f32.mrf.mxu0
    %v913 = vadd.f32 %v800, %v912
    %914 = vmatmul.f32.gmra.mxu0 %v412
    %v915 = vpop.f32.mrf.mxu0
    %v916 = vadd.f32 %v803, %v915
    %917 = vmatmul.f32.gmra.mxu0 %v414
    %v918 = vpop.f32.mrf.mxu0
    %v919 = vadd.f32 %v806, %v918
    %920 = vmatmul.f32.gmra.mxu0 %v416
    %v921 = vpop.f32.mrf.mxu0
    %v922 = vadd.f32 %v809, %v921
    %923 = vmatmul.f32.gmra.mxu0 %v418
    %v924 = vpop.f32.mrf.mxu0
    %v925 = vadd.f32 %v812, %v924
    %926 = vmatmul.f32.gmra.mxu0 %v420
    %v927 = vpop.f32.mrf.mxu0
    %v928 = vadd.f32 %v815, %v927
    %929 = vmatmul.f32.gmra.mxu0 %v422
    %v930 = vpop.f32.mrf.mxu0
    %v931 = vadd.f32 %v818, %v930
    %932 = vmatmul.f32.gmra.mxu0 %v424
    %v933 = vpop.f32.mrf.mxu0
    %v934 = vadd.f32 %v821, %v933
    %935 = vmatmul.f32.gmra.mxu0 %v426
    %v936 = vpop.f32.mrf.mxu0
    %v937 = vadd.f32 %v824, %v936
    %938 = vmatmul.f32.gmra.mxu0 %v428
    %v939 = vpop.f32.mrf.mxu0
    %v940 = vadd.f32 %v827, %v939
    %941 = vmatmul.f32.gmra.mxu0 %v430
    %v942 = vpop.f32.mrf.mxu0
    %v943 = vadd.f32 %v830, %v942
    %944 = vmatmul.f32.gmra.mxu0 %v432
    %v945 = vpop.f32.mrf.mxu0
    %v946 = vadd.f32 %v833, %v945
    %947 = vmatmul.f32.gmra.mxu0 %v434
    %v948 = vpop.f32.mrf.mxu0
    %v949 = vadd.f32 %v836, %v948
    %950 = vdwg.mxu0
    %v951 = vmax.f32 %v630, 0.0
    %v952 = vmax.f32 %v856, 0.0
    %v953 = vmax.f32 %v633, 0.0
    %v954 = vmax.f32 %v859, 0.0
    %v955 = vmax.f32 %v636, 0.0
    %v956 = vmax.f32 %v862, 0.0
    %v957 = vmax.f32 %v639, 0.0
    %v958 = vmax.f32 %v865, 0.0
    %v959 = vmax.f32 %v642, 0.0
    %v960 = vmax.f32 %v868, 0.0
    %v961 = vmax.f32 %v645, 0.0
    %v962 = vmax.f32 %v871, 0.0
    %v963 = vmax.f32 %v648, 0.0
    %v964 = vmax.f32 %v874, 0.0
    %v965 = vmax.f32 %v651, 0.0
    %v966 = vmax.f32 %v877, 0.0
    %v967 = vmax.f32 %v654, 0.0
    %v968 = vmax.f32 %v880, 0.0
    %v969 = vmax.f32 %v657, 0.0
    %v970 = vmax.f32 %v883, 0.0
    %v971 = vmax.f32 %v660, 0.0
    %v972 = vmax.f32 %v886, 0.0
    %v973 = vmax.f32 %v663, 0.0
    %v974 = vmax.f32 %v889, 0.0
    %v975 = vmax.f32 %v666, 0.0
    %v976 = vmax.f32 %v892, 0.0
    %v977 = vmax.f32 %v669, 0.0
    %v978 = vmax.f32 %v895, 0.0
    %v979 = vmax.f32 %v672, 0.0
    %v980 = vmax.f32 %v898, 0.0
    %v981 = vmax.f32 %v675, 0.0
    %v982 = vmax.f32 %v901, 0.0
    %v983 = vmax.f32 %v678, 0.0
    %v984 = vmax.f32 %v904, 0.0
    %v985 = vmax.f32 %v681, 0.0
    %v986 = vmax.f32 %v907, 0.0
    %v987 = vmax.f32 %v684, 0.0
    %v988 = vmax.f32 %v910, 0.0
    %v989 = vmax.f32 %v687, 0.0
    %v990 = vmax.f32 %v913, 0.0
    %v991 = vmax.f32 %v690, 0.0
    %v992 = vmax.f32 %v916, 0.0
    %v993 = vmax.f32 %v693, 0.0
    %v994 = vmax.f32 %v919, 0.0
    %v995 = vmax.f32 %v696, 0.0
    %v996 = vmax.f32 %v922, 0.0
    %v997 = vmax.f32 %v699, 0.0
    %v998 = vmax.f32 %v925, 0.0
    %v999 = vmax.f32 %v702, 0.0
    %v1000 = vmax.f32 %v928, 0.0
    %v1001 = vmax.f32 %v705, 0.0
    %v1002 = vmax.f32 %v931, 0.0
    %v1003 = vmax.f32 %v708, 0.0
    %v1004 = vmax.f32 %v934, 0.0
    %v1005 = vmax.f32 %v711, 0.0
    %v1006 = vmax.f32 %v937, 0.0
    %v1007 = vmax.f32 %v714, 0.0
    %v1008 = vmax.f32 %v940, 0.0
    %v1009 = vmax.f32 %v717, 0.0
    %v1010 = vmax.f32 %v943, 0.0
    %v1011 = vmax.f32 %v720, 0.0
    %v1012 = vmax.f32 %v946, 0.0
    %v1013 = vmax.f32 %v723, 0.0
    %v1014 = vmax.f32 %v949, 0.0
    %v1015 = vld [vmem:[#allocation8] sm:$0xff]
    %v1016 = vld [vmem:[#allocation8 + $0x8] sm:$0xff]
    %v1017 = vld [vmem:[#allocation8 + $0x10] sm:$0xff]
    %v1018 = vld [vmem:[#allocation8 + $0x18] sm:$0xff]
    %v1019 = vld [vmem:[#allocation8 + $0x20] sm:$0xff]
    %v1020 = vld [vmem:[#allocation8 + $0x28] sm:$0xff]
    %v1021 = vld [vmem:[#allocation8 + $0x30] sm:$0xff]
    %v1022 = vld [vmem:[#allocation8 + $0x38] sm:$0xff]
    %v1023 = vld [vmem:[#allocation8 + $0x40] sm:$0xff]
    %v1024 = vld [vmem:[#allocation8 + $0x48] sm:$0xff]
    %v1025 = vld [vmem:[#allocation8 + $0x50] sm:$0xff]
    %v1026 = vld [vmem:[#allocation8 + $0x58] sm:$0xff]
    %v1027 = vld [vmem:[#allocation8 + $0x60] sm:$0xff]
    %v1028 = vld [vmem:[#allocation8 + $0x68] sm:$0xff]
    %v1029 = vld [vmem:[#allocation8 + $0x70] sm:$0xff]
    %v1030 = vld [vmem:[#allocation8 + $0x78] sm:$0xff]
    %v1031 = vld [vmem:[#allocation8 + $0x80] sm:$0xff]
    %v1032 = vld [vmem:[#allocation8 + $0x88] sm:$0xff]
    %v1033 = vld [vmem:[#allocation8 + $0x90] sm:$0xff]
    %v1034 = vld [vmem:[#allocation8 + $0x98] sm:$0xff]
    %v1035 = vld [vmem:[#allocation8 + $0xa0] sm:$0xff]
    %v1036 = vld [vmem:[#allocation8 + $0xa8] sm:$0xff]
    %v1037 = vld [vmem:[#allocation8 + $0xb0] sm:$0xff]
    %v1038 = vld [vmem:[#allocation8 + $0xb8] sm:$0xff]
    %v1039 = vld [vmem:[#allocation8 + $0xc0] sm:$0xff]
    %v1040 = vld [vmem:[#allocation8 + $0xc8] sm:$0xff]
    %v1041 = vld [vmem:[#allocation8 + $0xd0] sm:$0xff]
    %v1042 = vld [vmem:[#allocation8 + $0xd8] sm:$0xff]
    %v1043 = vld [vmem:[#allocation8 + $0xe0] sm:$0xff]
    %v1044 = vld [vmem:[#allocation8 + $0xe8] sm:$0xff]
    %v1045 = vld [vmem:[#allocation8 + $0xf0] sm:$0xff]
    %v1046 = vld [vmem:[#allocation8 + $0xf8] sm:$0xff]
    %1047 = vmatpush.msra.mxu0 %v1030
    %1048 = vmatpush.msra.mxu0 %v1029
    %1049 = vmatpush.msra.mxu0 %v1028
    %1050 = vmatpush.msra.mxu0 %v1027
    %1051 = vmatpush.msra.mxu0 %v1026
    %1052 = vmatpush.msra.mxu0 %v1025
    %1053 = vmatpush.msra.mxu0 %v1024
    %1054 = vmatpush.msra.mxu0 %v1023
    %1055 = vmatpush.msra.mxu0 %v1022
    %1056 = vmatpush.msra.mxu0 %v1021
    %1057 = vmatpush.msra.mxu0 %v1020
    %1058 = vmatpush.msra.mxu0 %v1019
    %1059 = vmatpush.msra.mxu0 %v1018
    %1060 = vmatpush.msra.mxu0 %v1017
    %1061 = vmatpush.msra.mxu0 %v1016
    %1062 = vmatpush.msra.mxu0 %v1015
    %1063 = vmatmul.f32.gmra.mxu0 %v951
    %v1064 = vpop.f32.mrf.mxu0
    %v1065 = vadd.f32 0.0, %v1064
    %1066 = vmatmul.f32.gmra.mxu0 %v953
    %v1067 = vpop.f32.mrf.mxu0
    %v1068 = vadd.f32 0.0, %v1067
    %1069 = vmatmul.f32.gmra.mxu0 %v955
    %v1070 = vpop.f32.mrf.mxu0
    %v1071 = vadd.f32 0.0, %v1070
    %1072 = vmatmul.f32.gmra.mxu0 %v957
    %v1073 = vpop.f32.mrf.mxu0
    %v1074 = vadd.f32 0.0, %v1073
    %1075 = vmatmul.f32.gmra.mxu0 %v959
    %v1076 = vpop.f32.mrf.mxu0
    %v1077 = vadd.f32 0.0, %v1076
    %1078 = vmatmul.f32.gmra.mxu0 %v961
    %v1079 = vpop.f32.mrf.mxu0
    %v1080 = vadd.f32 0.0, %v1079
    %1081 = vmatmul.f32.gmra.mxu0 %v963
    %v1082 = vpop.f32.mrf.mxu0
    %v1083 = vadd.f32 0.0, %v1082
    %1084 = vmatmul.f32.gmra.mxu0 %v965
    %v1085 = vpop.f32.mrf.mxu0
    %v1086 = vadd.f32 0.0, %v1085
    %1087 = vmatmul.f32.gmra.mxu0 %v967
    %v1088 = vpop.f32.mrf.mxu0
    %v1089 = vadd.f32 0.0, %v1088
    %1090 = vmatmul.f32.gmra.mxu0 %v969
    %v1091 = vpop.f32.mrf.mxu0
    %v1092 = vadd.f32 0.0, %v1091
    %1093 = vmatmul.f32.gmra.mxu0 %v971
    %v1094 = vpop.f32.mrf.mxu0
    %v1095 = vadd.f32 0.0, %v1094
    %1096 = vmatmul.f32.gmra.mxu0 %v973
    %v1097 = vpop.f32.mrf.mxu0
    %v1098 = vadd.f32 0.0, %v1097
    %1099 = vmatmul.f32.gmra.mxu0 %v975
    %v1100 = vpop.f32.mrf.mxu0
    %v1101 = vadd.f32 0.0, %v1100
    %1102 = vmatmul.f32.gmra.mxu0 %v977
    %v1103 = vpop.f32.mrf.mxu0
    %v1104 = vadd.f32 0.0, %v1103
    %1105 = vmatmul.f32.gmra.mxu0 %v979
    %v1106 = vpop.f32.mrf.mxu0
    %v1107 = vadd.f32 0.0, %v1106
    %1108 = vmatmul.f32.gmra.mxu0 %v981
    %v1109 = vpop.f32.mrf.mxu0
    %v1110 = vadd.f32 0.0, %v1109
    %1111 = vmatmul.f32.gmra.mxu0 %v983
    %v1112 = vpop.f32.mrf.mxu0
    %v1113 = vadd.f32 0.0, %v1112
    %1114 = vmatmul.f32.gmra.mxu0 %v985
    %v1115 = vpop.f32.mrf.mxu0
    %v1116 = vadd.f32 0.0, %v1115
    %1117 = vmatmul.f32.gmra.mxu0 %v987
    %v1118 = vpop.f32.mrf.mxu0
    %v1119 = vadd.f32 0.0, %v1118
    %1120 = vmatmul.f32.gmra.mxu0 %v989
    %v1121 = vpop.f32.mrf.mxu0
    %v1122 = vadd.f32 0.0, %v1121
    %1123 = vmatmul.f32.gmra.mxu0 %v991
    %v1124 = vpop.f32.mrf.mxu0
    %v1125 = vadd.f32 0.0, %v1124
    %1126 = vmatmul.f32.gmra.mxu0 %v993
    %v1127 = vpop.f32.mrf.mxu0
    %v1128 = vadd.f32 0.0, %v1127
    %1129 = vmatmul.f32.gmra.mxu0 %v995
    %v1130 = vpop.f32.mrf.mxu0
    %v1131 = vadd.f32 0.0, %v1130
    %1132 = vmatmul.f32.gmra.mxu0 %v997
    %v1133 = vpop.f32.mrf.mxu0
    %v1134 = vadd.f32 0.0, %v1133
    %1135 = vmatmul.f32.gmra.mxu0 %v999
    %v1136 = vpop.f32.mrf.mxu0
    %v1137 = vadd.f32 0.0, %v1136
    %1138 = vmatmul.f32.gmra.mxu0 %v1001
    %v1139 = vpop.f32.mrf.mxu0
    %v1140 = vadd.f32 0.0, %v1139
    %1141 = vmatmul.f32.gmra.mxu0 %v1003
    %v1142 = vpop.f32.mrf.mxu0
    %v1143 = vadd.f32 0.0, %v1142
    %1144 = vmatmul.f32.gmra.mxu0 %v1005
    %v1145 = vpop.f32.mrf.mxu0
    %v1146 = vadd.f32 0.0, %v1145
    %1147 = vmatmul.f32.gmra.mxu0 %v1007
    %v1148 = vpop.f32.mrf.mxu0
    %v1149 = vadd.f32 0.0, %v1148
    %1150 = vmatmul.f32.gmra.mxu0 %v1009
    %v1151 = vpop.f32.mrf.mxu0
    %v1152 = vadd.f32 0.0, %v1151
    %1153 = vmatmul.f32.gmra.mxu0 %v1011
    %v1154 = vpop.f32.mrf.mxu0
    %v1155 = vadd.f32 0.0, %v1154
    %1156 = vmatmul.f32.gmra.mxu0 %v1013
    %v1157 = vpop.f32.mrf.mxu0
    %v1158 = vadd.f32 0.0, %v1157
    %1159 = vdwg.mxu0
    %1160 = vmatpush.msra.mxu0 %v1046
    %1161 = vmatpush.msra.mxu0 %v1045
    %1162 = vmatpush.msra.mxu0 %v1044
    %1163 = vmatpush.msra.mxu0 %v1043
    %1164 = vmatpush.msra.mxu0 %v1042
    %1165 = vmatpush.msra.mxu0 %v1041
    %1166 = vmatpush.msra.mxu0 %v1040
    %1167 = vmatpush.msra.mxu0 %v1039
    %1168 = vmatpush.msra.mxu0 %v1038
    %1169 = vmatpush.msra.mxu0 %v1037
    %1170 = vmatpush.msra.mxu0 %v1036
    %1171 = vmatpush.msra.mxu0 %v1035
    %1172 = vmatpush.msra.mxu0 %v1034
    %1173 = vmatpush.msra.mxu0 %v1033
    %1174 = vmatpush.msra.mxu0 %v1032
    %1175 = vmatpush.msra.mxu0 %v1031
    %1176 = vmatmul.f32.gmra.mxu0 %v952
    %v1177 = vpop.f32.mrf.mxu0
    %v1178 = vadd.f32 %v1065, %v1177
    %1179 = vmatmul.f32.gmra.mxu0 %v954
    %v1180 = vpop.f32.mrf.mxu0
    %v1181 = vadd.f32 %v1068, %v1180
    %1182 = vmatmul.f32.gmra.mxu0 %v956
    %v1183 = vpop.f32.mrf.mxu0
    %v1184 = vadd.f32 %v1071, %v1183
    %1185 = vmatmul.f32.gmra.mxu0 %v958
    %v1186 = vpop.f32.mrf.mxu0
    %v1187 = vadd.f32 %v1074, %v1186
    %1188 = vmatmul.f32.gmra.mxu0 %v960
    %v1189 = vpop.f32.mrf.mxu0
    %v1190 = vadd.f32 %v1077, %v1189
    %1191 = vmatmul.f32.gmra.mxu0 %v962
    %v1192 = vpop.f32.mrf.mxu0
    %v1193 = vadd.f32 %v1080, %v1192
    %1194 = vmatmul.f32.gmra.mxu0 %v964
    %v1195 = vpop.f32.mrf.mxu0
    %v1196 = vadd.f32 %v1083, %v1195
    %1197 = vmatmul.f32.gmra.mxu0 %v966
    %v1198 = vpop.f32.mrf.mxu0
    %v1199 = vadd.f32 %v1086, %v1198
    %1200 = vmatmul.f32.gmra.mxu0 %v968
    %v1201 = vpop.f32.mrf.mxu0
    %v1202 = vadd.f32 %v1089, %v1201
    %1203 = vmatmul.f32.gmra.mxu0 %v970
    %v1204 = vpop.f32.mrf.mxu0
    %v1205 = vadd.f32 %v1092, %v1204
    %1206 = vmatmul.f32.gmra.mxu0 %v972
    %v1207 = vpop.f32.mrf.mxu0
    %v1208 = vadd.f32 %v1095, %v1207
    %1209 = vmatmul.f32.gmra.mxu0 %v974
    %v1210 = vpop.f32.mrf.mxu0
    %v1211 = vadd.f32 %v1098, %v1210
    %1212 = vmatmul.f32.gmra.mxu0 %v976
    %v1213 = vpop.f32.mrf.mxu0
    %v1214 = vadd.f32 %v1101, %v1213
    %1215 = vmatmul.f32.gmra.mxu0 %v978
    %v1216 = vpop.f32.mrf.mxu0
    %v1217 = vadd.f32 %v1104, %v1216
    %1218 = vmatmul.f32.gmra.mxu0 %v980
    %v1219 = vpop.f32.mrf.mxu0
    %v1220 = vadd.f32 %v1107, %v1219
    %1221 = vmatmul.f32.gmra.mxu0 %v982
    %v1222 = vpop.f32.mrf.mxu0
    %v1223 = vadd.f32 %v1110, %v1222
    %1224 = vmatmul.f32.gmra.mxu0 %v984
    %v1225 = vpop.f32.mrf.mxu0
    %v1226 = vadd.f32 %v1113, %v1225
    %1227 = vmatmul.f32.gmra.mxu0 %v986
    %v1228 = vpop.f32.mrf.mxu0
    %v1229 = vadd.f32 %v1116, %v1228
    %1230 = vmatmul.f32.gmra.mxu0 %v988
    %v1231 = vpop.f32.mrf.mxu0
    %v1232 = vadd.f32 %v1119, %v1231
    %1233 = vmatmul.f32.gmra.mxu0 %v990
    %v1234 = vpop.f32.mrf.mxu0
    %v1235 = vadd.f32 %v1122, %v1234
    %1236 = vmatmul.f32.gmra.mxu0 %v992
    %v1237 = vpop.f32.mrf.mxu0
    %v1238 = vadd.f32 %v1125, %v1237
    %1239 = vmatmul.f32.gmra.mxu0 %v994
    %v1240 = vpop.f32.mrf.mxu0
    %v1241 = vadd.f32 %v1128, %v1240
    %1242 = vmatmul.f32.gmra.mxu0 %v996
    %v1243 = vpop.f32.mrf.mxu0
    %v1244 = vadd.f32 %v1131, %v1243
    %1245 = vmatmul.f32.gmra.mxu0 %v998
    %v1246 = vpop.f32.mrf.mxu0
    %v1247 = vadd.f32 %v1134, %v1246
    %1248 = vmatmul.f32.gmra.mxu0 %v1000
    %v1249 = vpop.f32.mrf.mxu0
    %v1250 = vadd.f32 %v1137, %v1249
    %1251 = vmatmul.f32.gmra.mxu0 %v1002
    %v1252 = vpop.f32.mrf.mxu0
    %v1253 = vadd.f32 %v1140, %v1252
    %1254 = vmatmul.f32.gmra.mxu0 %v1004
    %v1255 = vpop.f32.mrf.mxu0
    %v1256 = vadd.f32 %v1143, %v1255
    %1257 = vmatmul.f32.gmra.mxu0 %v1006
    %v1258 = vpop.f32.mrf.mxu0
    %v1259 = vadd.f32 %v1146, %v1258
    %1260 = vmatmul.f32.gmra.mxu0 %v1008
    %v1261 = vpop.f32.mrf.mxu0
    %v1262 = vadd.f32 %v1149, %v1261
    %1263 = vmatmul.f32.gmra.mxu0 %v1010
    %v1264 = vpop.f32.mrf.mxu0
    %v1265 = vadd.f32 %v1152, %v1264
    %1266 = vmatmul.f32.gmra.mxu0 %v1012
    %v1267 = vpop.f32.mrf.mxu0
    %v1268 = vadd.f32 %v1155, %v1267
    %1269 = vmatmul.f32.gmra.mxu0 %v1014
    %v1270 = vpop.f32.mrf.mxu0
    %v1271 = vadd.f32 %v1158, %v1270
    %1272 = vdwg.mxu0
    %1273 = vxpose.xlu0.b32.start [1/16] %v1178, 128
    %1274 = vxpose.xlu0.b32.cont [2/16] %v1181, 128
    %1275 = vxpose.xlu0.b32.cont [3/16] %v1184, 128
    %1276 = vxpose.xlu0.b32.cont [4/16] %v1187, 128
    %1277 = vxpose.xlu0.b32.cont [5/16] %v1190, 128
    %1278 = vxpose.xlu0.b32.cont [6/16] %v1193, 128
    %1279 = vxpose.xlu0.b32.cont [7/16] %v1196, 128
    %1280 = vxpose.xlu0.b32.cont [8/16] %v1199, 128
    %1281 = vxpose.xlu0.b32.cont [9/16] %v1202, 128
    %1282 = vxpose.xlu0.b32.cont [10/16] %v1205, 128
    %1283 = vxpose.xlu0.b32.cont [11/16] %v1208, 128
    %1284 = vxpose.xlu0.b32.cont [12/16] %v1211, 128
    %1285 = vxpose.xlu0.b32.cont [13/16] %v1214, 128
    %1286 = vxpose.xlu0.b32.cont [14/16] %v1217, 128
    %1287 = vxpose.xlu0.b32.cont [15/16] %v1220, 128
    %1288 = vxpose.xlu0.b32.end [16/16] %v1223, 128
    %v1289 = vpop.trf.xlu0
    %v1290 = vpop.trf.xlu0
    %v1291 = vpop.trf.xlu0
    %v1292 = vpop.trf.xlu0
    %v1293 = vpop.trf.xlu0
    %v1294 = vpop.trf.xlu0
    %v1295 = vpop.trf.xlu0
    %v1296 = vpop.trf.xlu0
    %v1297 = vpop.trf.xlu0
    %v1298 = vpop.trf.xlu0
    %v1299 = vpop.trf.xlu0
    %v1300 = vpop.trf.xlu0
    %v1301 = vpop.trf.xlu0
    %v1302 = vpop.trf.xlu0
    %v1303 = vpop.trf.xlu0
    %v1304 = vpop.trf.xlu0
    %1305 = vxpose.xlu0.b32.start [1/16] %v1226, 128
    %1306 = vxpose.xlu0.b32.cont [2/16] %v1229, 128
    %1307 = vxpose.xlu0.b32.cont [3/16] %v1232, 128
    %1308 = vxpose.xlu0.b32.cont [4/16] %v1235, 128
    %1309 = vxpose.xlu0.b32.cont [5/16] %v1238, 128
    %1310 = vxpose.xlu0.b32.cont [6/16] %v1241, 128
    %1311 = vxpose.xlu0.b32.cont [7/16] %v1244, 128
    %1312 = vxpose.xlu0.b32.cont [8/16] %v1247, 128
    %1313 = vxpose.xlu0.b32.cont [9/16] %v1250, 128
    %1314 = vxpose.xlu0.b32.cont [10/16] %v1253, 128
    %1315 = vxpose.xlu0.b32.cont [11/16] %v1256, 128
    %1316 = vxpose.xlu0.b32.cont [12/16] %v1259, 128
    %1317 = vxpose.xlu0.b32.cont [13/16] %v1262, 128
    %1318 = vxpose.xlu0.b32.cont [14/16] %v1265, 128
    %1319 = vxpose.xlu0.b32.cont [15/16] %v1268, 128
    %1320 = vxpose.xlu0.b32.end [16/16] %v1271, 128
    %v1321 = vpop.trf.xlu0
    %v1322 = vpop.trf.xlu0
    %v1323 = vpop.trf.xlu0
    %v1324 = vpop.trf.xlu0
    %v1325 = vpop.trf.xlu0
    %v1326 = vpop.trf.xlu0
    %v1327 = vpop.trf.xlu0
    %v1328 = vpop.trf.xlu0
    %v1329 = vpop.trf.xlu0
    %v1330 = vpop.trf.xlu0
    %v1331 = vpop.trf.xlu0
    %v1332 = vpop.trf.xlu0
    %v1333 = vpop.trf.xlu0
    %v1334 = vpop.trf.xlu0
    %v1335 = vpop.trf.xlu0
    %v1336 = vpop.trf.xlu0
    %v1338 = vrot.slane %v1321, 7
    %vm1340 = vcmask 1040384
    %v1341 = vsel %vm1340, %v1289, %v1338
    %1342 = vst [vmem:[#allocation10] sm:$0x3] %v1341
    // Predicated region
    $region34: #{tpu_custom_call.1} parent=1 // pred_check
      _
    $region35: #{tpu_custom_call.1} parent=1 // pred_check_branch
      %1344 = sbr.rel (0) target = $region37
    $region36: #{tpu_custom_call.1} parent=1 // pred_region
      %1346 = vsyncadd [#allocation4], 0
      %s1348 = sshll.u32 [#allocation10], 4
      %s1349 = int_to_ptr.vmem [resolvable:$true] %s1348
      %s1350 = sshll.u32 %s4, 4
      %s1351 = int_to_ptr.hbm [resolvable:$true] %s1350
      %1353 = dma.vmem_to_hbm [thread:$0]  %s1349, 32, %s1351, [#allocation4]
    $region37: #{tpu_custom_call.1} parent=1 // pred_fallthru
      _
    // Predicated region
    $region38: #{tpu_custom_call.1} parent=1 // pred_check
      _
    $region39: #{tpu_custom_call.1} parent=1 // pred_check_branch
      %1355 = sbr.rel (0) target = $region41
    $region40: #{tpu_custom_call.1} parent=1 // pred_region
      %1357 = dma.done [#allocation4], 32
    $region41: #{tpu_custom_call.1} parent=1 // pred_fallthru
      _
    %1358 = vsyncpa [#allocation3], 1
    %1359 = vsyncpa [#allocation6], 1
    %1360 = vsyncpa [#allocation9], 1
    %1361 = vsyncpa [#allocation4], 1

</llo_original>
